<compile_context>
chip_gen: v6e
topology: v6e:2x2x1
jax: 0.10.0
libtpu: 0.0.40
codegen_flags: <defaults>
</compile_context>

<pallas_src>
import functools
import math

import numpy as np
import jax
import jax.numpy as jnp
from jax import lax
from jax.experimental import pallas as pl
from jax.experimental.pallas import tpu as pltpu

LANE = 128


def _convt_phase_kernel(x_ref, w_ref, o_ref, stats_ref, *,
                        s_h, s_w, Ho, Wo, n_tiles, need_row_mask, need_col_mask):
    """One (batch, H-tile) step of the phase-decomposed transposed conv.

    x_ref:     (1, tile_q, P, Wq, Kpad)  pre-gathered (im2col) input patches
    w_ref:     (P, Kpad, Cpad)           per-phase folded sub-kernels
    o_ref:     (1, tile_q, P, Wq, Cpad)  phase-blocked, lane-dense conv output tile
    stats_ref: (1, 1, 2, Cpad)           per-tile [sum, sumsq] partial BN statistics
    """
    _, tile_q, P, Wq, Cpad = o_ref.shape

    # --- phase-decomposed transposed conv: one MXU dot per sub-pixel phase ---
    for p in range(P):
        acc = lax.dot_general(
            x_ref[0, :, p, :, :], w_ref[p],
            dimension_numbers=(((2,), (0,)), ((), ())),
            preferred_element_type=jnp.float32)           # (tile_q, Wq, Cpad)
        o_ref[0, :, p, :, :] = acc.astype(o_ref.dtype)

    # --- fused partial BatchNorm statistics, once per tile (not per phase) ---
    def emit_stats(mask_rows, mask_cols):
        y = o_ref[0].astype(jnp.float32)                  # (tile_q, P, Wq, Cpad) from VMEM
        if mask_rows or mask_cols:
            mshape = (tile_q, P, Wq, 1)
            pid = lax.broadcasted_iota(jnp.int32, mshape, 1)
            valid = None
            if mask_rows:
                rid = lax.broadcasted_iota(jnp.int32, mshape, 0)
                q_glob = pl.program_id(1) * tile_q + rid
                valid = (q_glob * s_h + pid // s_w) < Ho
            if mask_cols:
                cid = lax.broadcasted_iota(jnp.int32, mshape, 2)
                vcol = (cid * s_w + pid % s_w) < Wo
                valid = vcol if valid is None else (valid & vcol)
            y = jnp.where(valid, y, 0.0)
        y2 = y.reshape(tile_q * P * Wq, Cpad)
        s1 = jnp.sum(y2, axis=0, keepdims=True)
        s2 = jnp.sum(y2 * y2, axis=0, keepdims=True)
        stats_ref[0, 0] = jnp.concatenate([s1, s2], axis=0)

    if need_row_mask:
        t = pl.program_id(1)

        @pl.when(t == n_tiles - 1)                        # only the last tile pays for the row mask
        def _():
            emit_stats(True, need_col_mask)

        @pl.when(t != n_tiles - 1)
        def _():
            emit_stats(False, need_col_mask)
    else:
        emit_stats(False, need_col_mask)


def conv_transpose_bn_relu(x_nchw, weight, bias, gamma, beta, *, stride, padding,
                           eps=1e-5, compute_dtype=jnp.float32):
    """Forward of `convT`: ConvTranspose2d + BatchNorm2d(train) + ReLU.

    x_nchw: (N, Cin, H, W) float32
    weight: (Cin, Cout, kH, kW)   -- PyTorch ConvTranspose2d weight layout
    bias, gamma, beta: (Cout,)
    Returns (N, Cout, Ho, Wo) float32 (NCHW, like PyTorch).
    """
    del bias  # per-channel conv bias is exactly cancelled by training-mode BatchNorm
    N, Cin, H, W = x_nchw.shape
    Cin_w, Cout, kH, kW = weight.shape
    assert Cin == Cin_w
    s, p = int(stride), int(padding)
    assert 0 <= p <= kH - 1 and p <= kW - 1, "padding must be <= kernel_size - 1"

    Ho = (H - 1) * s - 2 * p + kH
    Wo = (W - 1) * s - 2 * p + kW
    Hq, Wq = -(-Ho // s), -(-Wo // s)            # output rows/cols per phase
    T_h, T_w = -(-kH // s), -(-kW // s)          # taps per phase
    pad_h, pad_w = kH - 1 - p, kW - 1 - p

    d_h = [(pad_h - r) // s for r in range(s)]
    d_w = [(pad_w - r) // s for r in range(s)]
    u0_h = [(pad_h - r) % s for r in range(s)]
    u0_w = [(pad_w - r) % s for r in range(s)]
    top, left = max(d_h), max(d_w)
    bot = max(0, (Hq - 1) + (T_h - 1) - min(d_h) - (H - 1))
    right = max(0, (Wq - 1) + (T_w - 1) - min(d_w) - (W - 1))
    off_h = [top - d for d in d_h]
    off_w = [left - d for d in d_w]

    P = s * s
    K = T_h * T_w * Cin
    Kpad = -(-K // LANE) * LANE                  # lane-dense contraction dim
    Cpad = -(-Cout // LANE) * LANE               # lane-dense output channels
    in_itemsize = jnp.dtype(compute_dtype).itemsize

    # ---------- generation-aware VMEM budget and H-tile selection ----------
    try:
        vmem_cap = int(getattr(pltpu.get_tpu_info(), "vmem_capacity_bytes", 128 * 2**20))
    except Exception:  # pragma: no cover - defensive fallback
        vmem_cap = 128 * 2**20
    vmem_limit = max(16 * 2**20, min(int(0.7 * vmem_cap), 96 * 2**20))
    tile_target = 4 * 2**20 if vmem_cap <= 64 * 2**20 else 12 * 2**20

    row_out = P * Wq * Cpad * 4                  # f32 output bytes per phase-row
    row_in = P * Wq * Kpad * in_itemsize         # gathered-input bytes per phase-row
    w_bytes = P * Kpad * Cpad * in_itemsize
    m = 8 // math.gcd(Wq, 8)                     # keep M = tile_q*Wq a multiple of 8

    def fits(tq):
        need = 2 * tq * (row_out + row_in) + 2 * w_bytes + 4 * Cpad * 4
        return need <= int(0.6 * vmem_limit)

    tile_q = max(1, min(Hq, tile_target // max(row_out, 1)))
    if tile_q < Hq:
        tile_q = min(Hq, max(m, (tile_q // m) * m))
    while tile_q > m and not fits(tile_q):
        tile_q = max(m, ((tile_q - 1) // m) * m)
    while tile_q > 1 and not fits(tile_q):
        tile_q -= 1
    n_tiles = -(-Hq // tile_q)
    # v7x megacore: make sure there are >= 2 parallel grid steps when possible.
    if N * n_tiles < 2 and Hq > 1:
        half = -(-Hq // 2)
        if half >= m:
            half = max(m, (half // m) * m)
        if 0 < half < Hq:
            tile_q = half
            n_tiles = -(-Hq // tile_q)
    Hq_pad = n_tiles * tile_q

    need_row_mask = (Hq_pad * s != Ho)           # padded / partial rows only in the last tile
    need_col_mask = (Wq * s != Wo)

    # ---------- XLA-side prep: NHWC halo pad + per-phase im2col gather ----------
    x = jnp.transpose(x_nchw, (0, 2, 3, 1))                                   # (N,H,W,Cin)
    xpad = jnp.pad(x, ((0, 0), (top, bot), (left, right), (0, 0)))

    phase_patches = []
    for rh in range(s):
        for rw in range(s):
            taps = []
            for th in range(T_h):
                for tw in range(T_w):
                    hs = off_h[rh] + th
                    ws = off_w[rw] + tw
                    taps.append(xpad[:, hs:hs + Hq, ws:ws + Wq, :])
            phase_patches.append(taps[0] if len(taps) == 1
                                 else jnp.concatenate(taps, axis=-1))          # (N,Hq,Wq,K)
    xg = jnp.stack(phase_patches, axis=2)                                      # (N,Hq,P,Wq,K)
    xg = jnp.pad(xg, ((0, 0), (0, Hq_pad - Hq), (0, 0), (0, 0), (0, Kpad - K)))
    xg = xg.astype(compute_dtype)

    # Per-phase folded sub-kernels (flipped, transposed), zero-padded to (Kpad, Cpad).
    wf = jnp.transpose(weight[:, :, ::-1, ::-1], (2, 3, 0, 1))                 # (kH,kW,Cin,Cout)
    zero_tap = jnp.zeros((Cin, Cout), wf.dtype)

    def tap(rh, rw, th, tw):
        u = u0_h[rh] + s * th
        v = u0_w[rw] + s * tw
        return wf[u, v] if (u < kH and v < kW) else zero_tap

    w_phase = jnp.stack([
        jnp.concatenate([tap(rh, rw, th, tw) for th in range(T_h) for tw in range(T_w)],
                        axis=0)
        for rh in range(s) for rw in range(s)], axis=0)                        # (P,K,Cout)
    w_phase = jnp.pad(w_phase, ((0, 0), (0, Kpad - K), (0, Cpad - Cout))).astype(compute_dtype)

    # ---------- single Pallas pass: transposed conv + fused partial BN stats ----------
    conv_kernel = functools.partial(
        _convt_phase_kernel, s_h=s, s_w=s, Ho=Ho, Wo=Wo, n_tiles=n_tiles,
        need_row_mask=need_row_mask, need_col_mask=need_col_mask)

    conv_out, stats = pl.pallas_call(
        conv_kernel,
        out_shape=(jax.ShapeDtypeStruct((N, Hq_pad, P, Wq, Cpad), jnp.float32),
                   jax.ShapeDtypeStruct((N, n_tiles, 2, Cpad), jnp.float32)),
        grid_spec=pltpu.PrefetchScalarGridSpec(
            num_scalar_prefetch=0,
            grid=(N, n_tiles),
            in_specs=[
                pl.BlockSpec((1, tile_q, P, Wq, Kpad), lambda n, t: (n, t, 0, 0, 0)),
                pl.BlockSpec((P, Kpad, Cpad), lambda n, t: (0, 0, 0)),
            ],
            out_specs=[
                pl.BlockSpec((1, tile_q, P, Wq, Cpad), lambda n, t: (n, t, 0, 0, 0)),
                pl.BlockSpec((1, 1, 2, Cpad), lambda n, t: (n, t, 0, 0)),
            ],
        ),
        compiler_params=pltpu.CompilerParams(
            dimension_semantics=("parallel", "parallel"),
            vmem_limit_bytes=vmem_limit),
    )(xg, w_phase)

    # ---------- tiny XLA reduction: partial stats -> per-channel scale/shift ----------
    # TODO(synk): single-pass E[x^2]-E[x]^2 in f32 can cancel for |mean| >> std on
    # extreme activations; dropping the conv bias already centers it for this module.
    count = float(N * Ho * Wo)
    ssum = jnp.sum(stats[:, :, 0, :Cout], axis=(0, 1))
    ssq = jnp.sum(stats[:, :, 1, :Cout], axis=(0, 1))
    mean = ssum / count
    var = jnp.maximum(ssq / count - mean * mean, 0.0)      # biased batch variance
    inv = lax.rsqrt(var + eps)
    scale = gamma.astype(jnp.float32) * inv                # (Cout,)
    shift = beta.astype(jnp.float32) - mean * scale        # conv bias cancels in train-mode BN

    # ---------- BN + ReLU fused (by XLA) into the de-interleave/transpose ----------
    y = conv_out[..., :Cout]                               # (N, Hq_pad, P, Wq, Cout)
    y = jnp.maximum(y * scale + shift, 0.0)
    y = y.reshape(N, Hq_pad, s, s, Wq, Cout)
    y = jnp.transpose(y, (0, 5, 1, 2, 4, 3))               # (N, Cout, Hq_pad, s, Wq, s)
    y = y.reshape(N, Cout, Hq_pad * s, Wq * s)
    return y[:, :, :Ho, :Wo]


def _reference(x_nchw, weight, bias, gamma, beta, stride, padding, eps=1e-5):
    """Pure-JAX reference (same semantics as PyTorch convT in training mode)."""
    s, p = stride, padding
    kH, kW = weight.shape[2], weight.shape[3]
    w_oihw = jnp.transpose(weight, (1, 0, 2, 3))[:, :, ::-1, ::-1]
    y = lax.conv_general_dilated(
        x_nchw, w_oihw, window_strides=(1, 1),
        padding=[(kH - 1 - p, kH - 1 - p), (kW - 1 - p, kW - 1 - p)],
        lhs_dilation=(s, s),
        dimension_numbers=('NCHW', 'OIHW', 'NCHW'))
    y = y + bias[None, :, None, None]
    mean = jnp.mean(y, axis=(0, 2, 3), keepdims=True)
    var = jnp.mean(jnp.square(y - mean), axis=(0, 2, 3), keepdims=True)
    y = (y - mean) * lax.rsqrt(var + eps) * gamma[None, :, None, None] + beta[None, :, None, None]
    return jnp.maximum(y, 0.0)


if __name__ == "__main__":
    # convT(inC=4, outC=8, kernel_size=4, padding=1, stride=2, momentum=0.1)
    N, inC, H, W = 2, 4, 16, 16
    outC, k, pad, stride, momentum = 8, 4, 1, 2, 0.1
    # TODO(synk): `momentum` only affects BatchNorm running-stat updates, which do not
    # influence the training-mode forward output, so it is unused here.

    key = jax.random.PRNGKey(0)
    k1, k2, k3 = jax.random.split(key, 3)
    x = jax.random.normal(k1, (N, inC, H, W), jnp.float32)

    bound = 1.0 / float(np.sqrt(inC * k * k))
    weight = jax.random.uniform(k2, (inC, outC, k, k), jnp.float32, -bound, bound)
    bias = jax.random.uniform(k3, (outC,), jnp.float32, -bound, bound)
    gamma = jnp.ones((outC,), jnp.float32)    # BatchNorm2d default init
    beta = jnp.zeros((outC,), jnp.float32)

    fwd = jax.jit(functools.partial(conv_transpose_bn_relu, stride=stride, padding=pad))
    out = jax.block_until_ready(fwd(x, weight, bias, gamma, beta))

    Ho = (H - 1) * stride - 2 * pad + k
    Wo = (W - 1) * stride - 2 * pad + k
    assert out.shape == (N, outC, Ho, Wo), out.shape

    ref = _reference(x, weight, bias, gamma, beta, stride, pad)
    if not np.allclose(np.asarray(out), np.asarray(ref), rtol=1e-3, atol=1e-3):
        raise AssertionError("Pallas output does not match JAX reference")

    print("KERNEL_OK")
</pallas_src>

<mosaic_0001>
module attributes {stable_mosaic.version = 11 : i64} {
  func.func @_convt_phase_kernel(%arg0: i32, %arg1: i32, %arg2: memref<1x16x4x16x128xf32, #tpu.memory_space<vmem>>, %arg3: memref<4x128x128xf32, #tpu.memory_space<vmem>>, %arg4: memref<1x16x4x16x128xf32, #tpu.memory_space<vmem>>, %arg5: memref<1x1x2x128xf32, #tpu.memory_space<vmem>>) attributes {dimension_semantics = [#tpu.dimension_semantics<parallel>, #tpu.dimension_semantics<parallel>], iteration_bounds = array<i64: 2, 1>, scalar_prefetch = 0 : i64, scratch_operands = 0 : i64, tpu.core_type = #tpu.core_type<tc>, window_params = [{transform_indices = @transform_0, window_bounds = array<i64: 1, 16, 4, 16, 128>}, {pipeline_mode = #tpu.pipeline_mode<synchronous>, transform_indices = @transform_1, window_bounds = array<i64: 4, 128, 128>}, {transform_indices = @transform_2, window_bounds = array<i64: 1, 16, 4, 16, 128>}, {transform_indices = @transform_3, window_bounds = array<i64: 1, 1, 2, 128>}]} {
    %c0 = arith.constant 0 : index
    %c0_0 = arith.constant 0 : index
    %c0_1 = arith.constant 0 : index
    %c0_2 = arith.constant 0 : index
    %c0_3 = arith.constant 0 : index
    %0 = vector.load %arg2[%c0, %c0_0, %c0_1, %c0_2, %c0_3] : memref<1x16x4x16x128xf32, #tpu.memory_space<vmem>>, vector<1x16x1x16x128xf32>
    %1 = vector.shape_cast %0 : vector<1x16x1x16x128xf32> to vector<16x16x128xf32>
    %c0_4 = arith.constant 0 : index
    %c0_5 = arith.constant 0 : index
    %c0_6 = arith.constant 0 : index
    %2 = vector.load %arg3[%c0_4, %c0_5, %c0_6] : memref<4x128x128xf32, #tpu.memory_space<vmem>>, vector<1x128x128xf32>
    %3 = vector.shape_cast %2 : vector<1x128x128xf32> to vector<128x128xf32>
    %cst = arith.constant dense<0.000000e+00> : vector<16x16x128xf32>
    %4 = tpu.matmul %1, %3, %cst {dimension_numbers = #tpu.dot_dimension_numbers<[2], [0], [0, 1], [1], [0, 0, 0, 1, 1, 1], [], []>} : vector<16x16x128xf32>, vector<128x128xf32>, vector<16x16x128xf32> -> vector<16x16x128xf32>
    %c0_7 = arith.constant 0 : index
    %c0_8 = arith.constant 0 : index
    %c0_9 = arith.constant 0 : index
    %c0_10 = arith.constant 0 : index
    %c0_11 = arith.constant 0 : index
    %5 = vector.load %arg4[%c0_7, %c0_8, %c0_9, %c0_10, %c0_11] : memref<1x16x4x16x128xf32, #tpu.memory_space<vmem>>, vector<1x16x1x16x128xf32>
    %6 = vector.shape_cast %5 : vector<1x16x1x16x128xf32> to vector<16x16x128xf32>
    %7 = vector.shape_cast %4 : vector<16x16x128xf32> to vector<1x16x1x16x128xf32>
    tpu.vector_store %arg4[%c0_7, %c0_8, %c0_9, %c0_10, %c0_11], %7 {strides = array<i32>} : memref<1x16x4x16x128xf32, #tpu.memory_space<vmem>>, vector<1x16x1x16x128xf32>,
    %c0_12 = arith.constant 0 : index
    %c0_13 = arith.constant 0 : index
    %c1 = arith.constant 1 : index
    %c0_14 = arith.constant 0 : index
    %c0_15 = arith.constant 0 : index
    %8 = vector.load %arg2[%c0_12, %c0_13, %c1, %c0_14, %c0_15] : memref<1x16x4x16x128xf32, #tpu.memory_space<vmem>>, vector<1x16x1x16x128xf32>
    %9 = vector.shape_cast %8 : vector<1x16x1x16x128xf32> to vector<16x16x128xf32>
    %c1_16 = arith.constant 1 : index
    %c0_17 = arith.constant 0 : index
    %c0_18 = arith.constant 0 : index
    %10 = vector.load %arg3[%c1_16, %c0_17, %c0_18] : memref<4x128x128xf32, #tpu.memory_space<vmem>>, vector<1x128x128xf32>
    %11 = vector.shape_cast %10 : vector<1x128x128xf32> to vector<128x128xf32>
    %cst_19 = arith.constant dense<0.000000e+00> : vector<16x16x128xf32>
    %12 = tpu.matmul %9, %11, %cst_19 {dimension_numbers = #tpu.dot_dimension_numbers<[2], [0], [0, 1], [1], [0, 0, 0, 1, 1, 1], [], []>} : vector<16x16x128xf32>, vector<128x128xf32>, vector<16x16x128xf32> -> vector<16x16x128xf32>
    %c0_20 = arith.constant 0 : index
    %c0_21 = arith.constant 0 : index
    %c1_22 = arith.constant 1 : index
    %c0_23 = arith.constant 0 : index
    %c0_24 = arith.constant 0 : index
    %13 = vector.load %arg4[%c0_20, %c0_21, %c1_22, %c0_23, %c0_24] : memref<1x16x4x16x128xf32, #tpu.memory_space<vmem>>, vector<1x16x1x16x128xf32>
    %14 = vector.shape_cast %13 : vector<1x16x1x16x128xf32> to vector<16x16x128xf32>
    %15 = vector.shape_cast %12 : vector<16x16x128xf32> to vector<1x16x1x16x128xf32>
    tpu.vector_store %arg4[%c0_20, %c0_21, %c1_22, %c0_23, %c0_24], %15 {strides = array<i32>} : memref<1x16x4x16x128xf32, #tpu.memory_space<vmem>>, vector<1x16x1x16x128xf32>,
    %c0_25 = arith.constant 0 : index
    %c0_26 = arith.constant 0 : index
    %c2 = arith.constant 2 : index
    %c0_27 = arith.constant 0 : index
    %c0_28 = arith.constant 0 : index
    %16 = vector.load %arg2[%c0_25, %c0_26, %c2, %c0_27, %c0_28] : memref<1x16x4x16x128xf32, #tpu.memory_space<vmem>>, vector<1x16x1x16x128xf32>
    %17 = vector.shape_cast %16 : vector<1x16x1x16x128xf32> to vector<16x16x128xf32>
    %c2_29 = arith.constant 2 : index
    %c0_30 = arith.constant 0 : index
    %c0_31 = arith.constant 0 : index
    %18 = vector.load %arg3[%c2_29, %c0_30, %c0_31] : memref<4x128x128xf32, #tpu.memory_space<vmem>>, vector<1x128x128xf32>
    %19 = vector.shape_cast %18 : vector<1x128x128xf32> to vector<128x128xf32>
    %cst_32 = arith.constant dense<0.000000e+00> : vector<16x16x128xf32>
    %20 = tpu.matmul %17, %19, %cst_32 {dimension_numbers = #tpu.dot_dimension_numbers<[2], [0], [0, 1], [1], [0, 0, 0, 1, 1, 1], [], []>} : vector<16x16x128xf32>, vector<128x128xf32>, vector<16x16x128xf32> -> vector<16x16x128xf32>
    %c0_33 = arith.constant 0 : index
    %c0_34 = arith.constant 0 : index
    %c2_35 = arith.constant 2 : index
    %c0_36 = arith.constant 0 : index
    %c0_37 = arith.constant 0 : index
    %21 = vector.load %arg4[%c0_33, %c0_34, %c2_35, %c0_36, %c0_37] : memref<1x16x4x16x128xf32, #tpu.memory_space<vmem>>, vector<1x16x1x16x128xf32>
    %22 = vector.shape_cast %21 : vector<1x16x1x16x128xf32> to vector<16x16x128xf32>
    %23 = vector.shape_cast %20 : vector<16x16x128xf32> to vector<1x16x1x16x128xf32>
    tpu.vector_store %arg4[%c0_33, %c0_34, %c2_35, %c0_36, %c0_37], %23 {strides = array<i32>} : memref<1x16x4x16x128xf32, #tpu.memory_space<vmem>>, vector<1x16x1x16x128xf32>,
    %c0_38 = arith.constant 0 : index
    %c0_39 = arith.constant 0 : index
    %c3 = arith.constant 3 : index
    %c0_40 = arith.constant 0 : index
    %c0_41 = arith.constant 0 : index
    %24 = vector.load %arg2[%c0_38, %c0_39, %c3, %c0_40, %c0_41] : memref<1x16x4x16x128xf32, #tpu.memory_space<vmem>>, vector<1x16x1x16x128xf32>
    %25 = vector.shape_cast %24 : vector<1x16x1x16x128xf32> to vector<16x16x128xf32>
    %c3_42 = arith.constant 3 : index
    %c0_43 = arith.constant 0 : index
    %c0_44 = arith.constant 0 : index
    %26 = vector.load %arg3[%c3_42, %c0_43, %c0_44] : memref<4x128x128xf32, #tpu.memory_space<vmem>>, vector<1x128x128xf32>
    %27 = vector.shape_cast %26 : vector<1x128x128xf32> to vector<128x128xf32>
    %cst_45 = arith.constant dense<0.000000e+00> : vector<16x16x128xf32>
    %28 = tpu.matmul %25, %27, %cst_45 {dimension_numbers = #tpu.dot_dimension_numbers<[2], [0], [0, 1], [1], [0, 0, 0, 1, 1, 1], [], []>} : vector<16x16x128xf32>, vector<128x128xf32>, vector<16x16x128xf32> -> vector<16x16x128xf32>
    %c0_46 = arith.constant 0 : index
    %c0_47 = arith.constant 0 : index
    %c3_48 = arith.constant 3 : index
    %c0_49 = arith.constant 0 : index
    %c0_50 = arith.constant 0 : index
    %29 = vector.load %arg4[%c0_46, %c0_47, %c3_48, %c0_49, %c0_50] : memref<1x16x4x16x128xf32, #tpu.memory_space<vmem>>, vector<1x16x1x16x128xf32>
    %30 = vector.shape_cast %29 : vector<1x16x1x16x128xf32> to vector<16x16x128xf32>
    %31 = vector.shape_cast %28 : vector<16x16x128xf32> to vector<1x16x1x16x128xf32>
    tpu.vector_store %arg4[%c0_46, %c0_47, %c3_48, %c0_49, %c0_50], %31 {strides = array<i32>} : memref<1x16x4x16x128xf32, #tpu.memory_space<vmem>>, vector<1x16x1x16x128xf32>,
    %c0_51 = arith.constant 0 : index
    %c0_52 = arith.constant 0 : index
    %c0_53 = arith.constant 0 : index
    %c0_54 = arith.constant 0 : index
    %c0_55 = arith.constant 0 : index
    %32 = vector.load %arg4[%c0_51, %c0_52, %c0_53, %c0_54, %c0_55] : memref<1x16x4x16x128xf32, #tpu.memory_space<vmem>>, vector<1x16x4x16x128xf32>
    %33 = vector.shape_cast %32 : vector<1x16x4x16x128xf32> to vector<16x4x16x128xf32>
    %34 = vector.shape_cast %33 : vector<16x4x16x128xf32> to vector<1024x128xf32>
    %cst_56 = arith.constant dense<0.000000e+00> : vector<128xf32>
    %35 = vector.multi_reduction <add>, %34, %cst_56 [0] : vector<1024x128xf32> to vector<128xf32>
    %36 = vector.shape_cast %35 : vector<128xf32> to vector<1x128xf32>
    %37 = arith.mulf %34, %34 : vector<1024x128xf32>
    %cst_57 = arith.constant dense<0.000000e+00> : vector<128xf32>
    %38 = vector.multi_reduction <add>, %37, %cst_57 [0] : vector<1024x128xf32> to vector<128xf32>
    %39 = vector.shape_cast %38 : vector<128xf32> to vector<1x128xf32>
    %40 = tpu.concatenate %36, %39 in 0 : vector<1x128xf32>, vector<1x128xf32> -> vector<2x128xf32>
    %c0_58 = arith.constant 0 : index
    %c0_59 = arith.constant 0 : index
    %c0_60 = arith.constant 0 : index
    %c0_61 = arith.constant 0 : index
    %41 = vector.load %arg5[%c0_58, %c0_59, %c0_60, %c0_61] : memref<1x1x2x128xf32, #tpu.memory_space<vmem>>, vector<1x1x2x128xf32>
    %42 = vector.shape_cast %41 : vector<1x1x2x128xf32> to vector<2x128xf32>
    %43 = vector.shape_cast %40 : vector<2x128xf32> to vector<1x1x2x128xf32>
    tpu.vector_store %arg5[%c0_58, %c0_59, %c0_60, %c0_61], %43 {strides = array<i32>} : memref<1x1x2x128xf32, #tpu.memory_space<vmem>>, vector<1x1x2x128xf32>,
    return
  }
  func.func @transform_0(%arg0: i32, %arg1: i32) -> (i32, i32, i32, i32, i32) {
    %c0_i32 = arith.constant 0 : i32
    %c0_i32_0 = arith.constant 0 : i32
    %c0_i32_1 = arith.constant 0 : i32
    %c0_i32_2 = arith.constant 0 : i32
    return %arg0, %arg1, %c0_i32, %c0_i32_0, %c0_i32_1 : i32, i32, i32, i32, i32
  }
  func.func @transform_1(%arg0: i32, %arg1: i32) -> (i32, i32, i32) {
    %c0_i32 = arith.constant 0 : i32
    %c0_i32_0 = arith.constant 0 : i32
    %c0_i32_1 = arith.constant 0 : i32
    %c0_i32_2 = arith.constant 0 : i32
    return %c0_i32, %c0_i32_0, %c0_i32_1 : i32, i32, i32
  }
  func.func @transform_2(%arg0: i32, %arg1: i32) -> (i32, i32, i32, i32, i32) {
    %c0_i32 = arith.constant 0 : i32
    %c0_i32_0 = arith.constant 0 : i32
    %c0_i32_1 = arith.constant 0 : i32
    %c0_i32_2 = arith.constant 0 : i32
    return %arg0, %arg1, %c0_i32, %c0_i32_0, %c0_i32_1 : i32, i32, i32, i32, i32
  }
  func.func @transform_3(%arg0: i32, %arg1: i32) -> (i32, i32, i32, i32) {
    %c0_i32 = arith.constant 0 : i32
    %c0_i32_0 = arith.constant 0 : i32
    %c0_i32_1 = arith.constant 0 : i32
    return %arg0, %arg1, %c0_i32, %c0_i32_0 : i32, i32, i32, i32
  }
}

</mosaic_0001>

<llo_original>
// kernel: conv_transpose_bn_relu.1
$region0: #{conv_transpose_bn_relu.1}
  #allocation0 [shape = 'u32[]', space=smem, size = 0x4, offset = 0x4, fixed_abs, tag = 'smem constant byte address 0x4 - core index']
  #allocation1 [shape = 'u32[144,128]{1,0:T(1,128)}', space=vmem, size = 0x12000, scoped, tag = 'internal scratch']
  %s0 = inlined_call_operand.vmem [shape: f32[2,16,4,16,128], index: 0, kind: input, shape index: {}]
  %s1 = inlined_call_operand.vmem [shape: f32[4,128,128], index: 1, kind: input, shape index: {}]
  %s2 = inlined_call_operand.vmem [shape: f32[2,16,4,16,128], index: 2, kind: output, shape index: {0}]
  %s3 = inlined_call_operand.vmem [shape: f32[2,1,2,128], index: 3, kind: output, shape index: {1}]
  %4 = xla_tuple %s2, %s3
  %s5 = sld [smem:[#allocation0]]
  $region49: #{conv_transpose_bn_relu.1} parent=0
    _
  %s7 = ssub.s32 1, %s5
  %s8 = scalar_select 0, %s7, %s5
  loop: start=0, step=1, limit=4
  $region2: #{conv_transpose_bn_relu.1} parent=0 // loop_pre_header
    _
  $region3: #{conv_transpose_bn_relu.1} parent=0 // loop_header
    %s10 = sphi 0, %s14
    %p11 = scmp.ge.s32.totalorder %s10, 4
    %s17 = sphi 0, %s29
    %s18 = sphi 0, %s25
    %s19 = sphi 0, %s17
    %s20 = sphi 0, %s18
    %s21 = sphi 0, %s19
    %s22 = sphi 0, %s20
    %s34 = sphi 0, %s36
    %s37 = sphi 0, %s34
    %s38 = sphi 0, %s37
    %s54 = sphi 0, %s38
    %s58 = sphi 0, %s58
    %s60 = sphi 0, %s58
    %s61 = sphi 0, %s60
    %s75 = sphi 0, %s61
    %s83 = sphi 0, %s85
    %s86 = sphi 0, %s83
    %s87 = sphi 0, %s86
    %s103 = sphi 0, %s87
    %s111 = sphi 0, %s113
    %s114 = sphi 0, %s111
    %s115 = sphi 0, %s114
    %s131 = sphi 0, %s115
  $region4: #{conv_transpose_bn_relu.1} parent=0 // loop_header_branch
    %13 = sbr.rel (%p11) target = $region8
  $region5: #{conv_transpose_bn_relu.1} parent=0 // loop_body
    %s15 = ssub.s32 %s10, 1
    %s16 = ssub.s32 %s10, 2
    %s23 = sadd.s32 1, %s18
    %p24 = scmp.ge.s32.totalorder %s23, 1
    %s25 = scalar_select %p24, 0, %s23
    %s26 = sadd.s32 1, %s17
    %s27 = scalar_select %p24, %s26, %s17
    %p28 = scmp.ge.s32.totalorder %s27, 2
    %s29 = scalar_select %p28, 0, %s27
    %s30 = ssub.s32 %s17, %s29
    %s31 = ssub.s32 %s18, %s25
    %s32 = sor.u32 %s30, %s31
    %p33 = scmp.eq.s32.totalorder %s32, 0
    %s35 = sadd.s32 %s34, 1
    %s36 = scalar_select %p33, %s34, %s35
    %p39 = pneg %p33
    %p40 = scmp.eq.s32.totalorder %s10, 1
    %p41 = por %p39, %p40
    %p42 = scmp.ne.s32.totalorder %s34, %s37
    %p43 = scmp.eq.s32.totalorder %s10, 0
    %p44 = por %p42, %p43
    %p45 = scmp.ne.s32.totalorder %s34, %s37
    %p46 = scmp.eq.s32.totalorder %s15, 1
    %p47 = por %p45, %p46
    %p48 = scmp.ne.s32.totalorder %s37, %s38
    %p49 = scmp.eq.s32.totalorder %s15, 0
    %p50 = por %p48, %p49
    %p51 = scmp.ne.s32.totalorder %s37, %s38
    %p52 = scmp.eq.s32.totalorder %s16, 1
    %p53 = por %p51, %p52
    %p55 = scmp.ne.s32.totalorder %s38, %s54
    %p56 = scmp.eq.s32.totalorder %s16, 0
    %p57 = por %p55, %p56
    %s59 = sadd.s32 %s58, 1
    %p62 = scmp.eq.s32.totalorder %s10, 1
    %p63 = scmp.ne.s32.totalorder %s58, %s60
    %p64 = scmp.eq.s32.totalorder %s10, 0
    %p65 = por %p63, %p64
    %p66 = scmp.ne.s32.totalorder %s58, %s60
    %p67 = scmp.eq.s32.totalorder %s15, 1
    %p68 = por %p66, %p67
    %p69 = scmp.ne.s32.totalorder %s60, %s61
    %p70 = scmp.eq.s32.totalorder %s15, 0
    %p71 = por %p69, %p70
    %p72 = scmp.ne.s32.totalorder %s60, %s61
    %p73 = scmp.eq.s32.totalorder %s16, 1
    %p74 = por %p72, %p73
    %p76 = scmp.ne.s32.totalorder %s61, %s75
    %p77 = scmp.eq.s32.totalorder %s16, 0
    %p78 = por %p76, %p77
    %s79 = ssub.s32 %s17, %s29
    %s80 = ssub.s32 %s18, %s25
    %s81 = sor.u32 %s79, %s80
    %p82 = scmp.eq.s32.totalorder %s81, 0
    %s84 = sadd.s32 %s83, 1
    %s85 = scalar_select %p82, %s83, %s84
    %p88 = pneg %p82
    %p89 = scmp.eq.s32.totalorder %s10, 1
    %p90 = por %p88, %p89
    %p91 = scmp.ne.s32.totalorder %s83, %s86
    %p92 = scmp.eq.s32.totalorder %s10, 0
    %p93 = por %p91, %p92
    %p94 = scmp.ne.s32.totalorder %s83, %s86
    %p95 = scmp.eq.s32.totalorder %s15, 1
    %p96 = por %p94, %p95
    %p97 = scmp.ne.s32.totalorder %s86, %s87
    %p98 = scmp.eq.s32.totalorder %s15, 0
    %p99 = por %p97, %p98
    %p100 = scmp.ne.s32.totalorder %s86, %s87
    %p101 = scmp.eq.s32.totalorder %s16, 1
    %p102 = por %p100, %p101
    %p104 = scmp.ne.s32.totalorder %s87, %s103
    %p105 = scmp.eq.s32.totalorder %s16, 0
    %p106 = por %p104, %p105
    %s107 = ssub.s32 %s17, %s29
    %s108 = ssub.s32 %s18, %s25
    %s109 = sor.u32 %s107, %s108
    %p110 = scmp.eq.s32.totalorder %s109, 0
    %s112 = sadd.s32 %s111, 1
    %s113 = scalar_select %p110, %s111, %s112
    %p116 = pneg %p110
    %p117 = scmp.eq.s32.totalorder %s10, 1
    %p118 = por %p116, %p117
    %p119 = scmp.ne.s32.totalorder %s111, %s114
    %p120 = scmp.eq.s32.totalorder %s10, 0
    %p121 = por %p119, %p120
    %p122 = scmp.ne.s32.totalorder %s111, %s114
    %p123 = scmp.eq.s32.totalorder %s15, 1
    %p124 = por %p122, %p123
    %p125 = scmp.ne.s32.totalorder %s114, %s115
    %p126 = scmp.eq.s32.totalorder %s15, 0
    %p127 = por %p125, %p126
    %p128 = scmp.ne.s32.totalorder %s114, %s115
    %p129 = scmp.eq.s32.totalorder %s16, 1
    %p130 = por %p128, %p129
    %p132 = scmp.ne.s32.totalorder %s115, %s131
    %p133 = scmp.eq.s32.totalorder %s16, 0
    %p134 = por %p132, %p133
    %p135 = scmp.le.s32.totalorder 1, %s10
    %p136 = scmp.lt.s32.totalorder %s10, 3
    %p137 = pnand %p135, %p136
    %p138 = pneg %p137
    // Predicated region
    $region9: #{conv_transpose_bn_relu.1} parent=5 // pred_check
      _
    $region10: #{conv_transpose_bn_relu.1} parent=5 // pred_check_branch
      %140 = sbr.rel (%p137) target = $region12
    $region11: #{conv_transpose_bn_relu.1} parent=5 // pred_region
      %s141 = ssub.s32 %s10, 1
      // Predicated region
      $region13: #{conv_transpose_bn_relu.1} parent=11 // pred_check
        %p142 = pneg %p71
      $region14: #{conv_transpose_bn_relu.1} parent=11 // pred_check_branch
        %144 = sbr.rel (%p142) target = $region16
      $region15: #{conv_transpose_bn_relu.1} parent=11 // pred_region
        _
      $region16: #{conv_transpose_bn_relu.1} parent=11 // pred_fallthru
        _
    $region12: #{conv_transpose_bn_relu.1} parent=5 // pred_fallthru
      _
    %p145 = scmp.lt.s32.totalorder %s10, 2
    // Predicated region
    $region17: #{conv_transpose_bn_relu.1} parent=5 // pred_check
      %p146 = pneg %p145
    $region18: #{conv_transpose_bn_relu.1} parent=5 // pred_check_branch
      %148 = sbr.rel (%p146) target = $region20
    $region19: #{conv_transpose_bn_relu.1} parent=5 // pred_region
      // Predicated region
      $region21: #{conv_transpose_bn_relu.1} parent=19 // pred_check
        %p149 = pneg %p44
      $region22: #{conv_transpose_bn_relu.1} parent=19 // pred_check_branch
        %151 = sbr.rel (%p149) target = $region24
      $region23: #{conv_transpose_bn_relu.1} parent=19 // pred_region
        %s152 = smul.u32 16, %s18
        %p153 = scmp.lt.s32.totalorder %s17, 1
        %s154 = scalar_select %p153, %s17, 1
        %p155 = scmp.lt.s32.totalorder %s152, 15
        %s156 = scalar_select %p155, %s152, 15
        %s157 = smul.addr %s156, 8
        %s158 = smul.addr %s154, 128
        %s159 = sadd.s32 %s157, %s158
        %s160 = smul.addr %s159, 8
        %s161 = scalar_lea.vmem %s0, %s160
        %s162 = smul.u32 16, %s18
      $region24: #{conv_transpose_bn_relu.1} parent=19 // pred_fallthru
        _
    $region20: #{conv_transpose_bn_relu.1} parent=5 // pred_fallthru
      _
    %p163 = scmp.le.s32.totalorder 1, %s10
    %p164 = scmp.lt.s32.totalorder %s10, 3
    %p165 = pnand %p163, %p164
    %p166 = pneg %p165
    // Predicated region
    $region25: #{conv_transpose_bn_relu.1} parent=5 // pred_check
      _
    $region26: #{conv_transpose_bn_relu.1} parent=5 // pred_check_branch
      %168 = sbr.rel (%p165) target = $region28
    $region27: #{conv_transpose_bn_relu.1} parent=5 // pred_region
      %s169 = ssub.s32 %s10, 1
      %s170 = smul.u32 16, %s20
      %p171 = scmp.lt.s32.totalorder %s19, 1
      %s172 = scalar_select %p171, %s19, 1
      %p173 = scmp.lt.s32.totalorder %s170, 15
      %s174 = scalar_select %p173, %s170, 15
      %s175 = smul.addr %s174, 8
      %s176 = smul.addr %s172, 128
      %s177 = sadd.s32 %s175, %s176
      %s178 = smul.addr %s177, 8
      %s179 = scalar_lea.vmem %s0, %s178
      %p180 = pneg %p50
      %p181 = pneg %p47
      %p182 = pneg %p71
      %p183 = pneg %p68
      %p184 = pneg %p99
      %p185 = pneg %p96
      %s186 = smul.u32 16, %s20
      %p187 = scmp.lt.s32.totalorder %s19, 1
      %s188 = scalar_select %p187, %s19, 1
      %p189 = scmp.lt.s32.totalorder %s186, 15
      %s190 = scalar_select %p189, %s186, 15
      %s191 = smul.addr %s190, 8
      %s192 = smul.addr %s188, 128
      %s193 = sadd.s32 %s191, %s192
      %s194 = smul.addr %s193, 8
      %s195 = scalar_lea.vmem %s2, %s194
      %p196 = pneg %p127
      %p197 = pneg %p124
      %p198 = scmp.lt.s32.totalorder %s19, 1
      %s199 = scalar_select %p198, %s19, 1
      %p200 = scmp.lt.s32.totalorder %s20, 0
      %s201 = scalar_select %p200, %s20, 0
      %s202 = sadd.s32 %s201, %s199
      %s203 = smul.addr %s202, 2
      %s204 = scalar_lea.vmem %s3, %s203
      %s205 = smul.u32 16, %s20
      %p206 = scmp.lt.s32.totalorder %s19, 1
      %s207 = scalar_select %p206, %s19, 1
      %p208 = scmp.lt.s32.totalorder %s205, 15
      %s209 = scalar_select %p208, %s205, 15
      %s210 = smul.addr %s209, 8
      %s211 = smul.addr %s207, 128
      %s212 = sadd.s32 %s210, %s211
      %s213 = smul.addr %s212, 8
      %s214 = scalar_lea.vmem %s0, %s213
      %s215 = smul.u32 16, %s20
      %s216 = smul.u32 16, %s20
      %p217 = scmp.lt.s32.totalorder %s19, 1
      %s218 = scalar_select %p217, %s19, 1
      %p219 = scmp.lt.s32.totalorder %s216, 15
      %s220 = scalar_select %p219, %s216, 15
      %s221 = smul.addr %s220, 8
      %s222 = smul.addr %s218, 128
      %s223 = sadd.s32 %s221, %s222
      %s224 = smul.addr %s223, 8
      %s225 = scalar_lea.vmem %s2, %s224
      %s226 = smul.u32 16, %s20
      %p227 = scmp.lt.s32.totalorder %s19, 1
      %s228 = scalar_select %p227, %s19, 1
      %p229 = scmp.lt.s32.totalorder %s20, 0
      %s230 = scalar_select %p229, %s20, 0
      %s231 = sadd.s32 %s230, %s228
      %s232 = smul.addr %s231, 2
      %s233 = scalar_lea.vmem %s3, %s232
      %v234 = vld [vmem:[%s214] sm:$0xff]
      %v235 = vld [vmem:[%s214 + $0x8] sm:$0xff]
      %v236 = vld [vmem:[%s214 + $0x40] sm:$0xff]
      %v237 = vld [vmem:[%s214 + $0x48] sm:$0xff]
      %v238 = vld [vmem:[%s214 + $0x80] sm:$0xff]
      %v239 = vld [vmem:[%s214 + $0x88] sm:$0xff]
      %v240 = vld [vmem:[%s214 + $0xc0] sm:$0xff]
      %v241 = vld [vmem:[%s214 + $0xc8] sm:$0xff]
      %v242 = vld [vmem:[%s214 + $0x100] sm:$0xff]
      %v243 = vld [vmem:[%s214 + $0x108] sm:$0xff]
      %v244 = vld [vmem:[%s214 + $0x140] sm:$0xff]
      %v245 = vld [vmem:[%s214 + $0x148] sm:$0xff]
      %v246 = vld [vmem:[%s214 + $0x180] sm:$0xff]
      %v247 = vld [vmem:[%s214 + $0x188] sm:$0xff]
      %v248 = vld [vmem:[%s214 + $0x1c0] sm:$0xff]
      %v249 = vld [vmem:[%s214 + $0x1c8] sm:$0xff]
      %v250 = vld [vmem:[%s214 + $0x200] sm:$0xff]
      %v251 = vld [vmem:[%s214 + $0x208] sm:$0xff]
      %v252 = vld [vmem:[%s214 + $0x240] sm:$0xff]
      %v253 = vld [vmem:[%s214 + $0x248] sm:$0xff]
      %v254 = vld [vmem:[%s214 + $0x280] sm:$0xff]
      %v255 = vld [vmem:[%s214 + $0x288] sm:$0xff]
      %v256 = vld [vmem:[%s214 + $0x2c0] sm:$0xff]
      %v257 = vld [vmem:[%s214 + $0x2c8] sm:$0xff]
      %v258 = vld [vmem:[%s214 + $0x300] sm:$0xff]
      %v259 = vld [vmem:[%s214 + $0x308] sm:$0xff]
      %v260 = vld [vmem:[%s214 + $0x340] sm:$0xff]
      %v261 = vld [vmem:[%s214 + $0x348] sm:$0xff]
      %v262 = vld [vmem:[%s214 + $0x380] sm:$0xff]
      %v263 = vld [vmem:[%s214 + $0x388] sm:$0xff]
      %v264 = vld [vmem:[%s214 + $0x3c0] sm:$0xff]
      %v265 = vld [vmem:[%s214 + $0x3c8] sm:$0xff]
      %v266 = vld [vmem:[%s1] sm:$0xff]
      %v267 = vld [vmem:[%s1 + $0x8] sm:$0xff]
      %v268 = vld [vmem:[%s1 + $0x10] sm:$0xff]
      %v269 = vld [vmem:[%s1 + $0x18] sm:$0xff]
      %v270 = vld [vmem:[%s1 + $0x20] sm:$0xff]
      %v271 = vld [vmem:[%s1 + $0x28] sm:$0xff]
      %v272 = vld [vmem:[%s1 + $0x30] sm:$0xff]
      %v273 = vld [vmem:[%s1 + $0x38] sm:$0xff]
      %v274 = vld [vmem:[%s1 + $0x40] sm:$0xff]
      %v275 = vld [vmem:[%s1 + $0x48] sm:$0xff]
      %v276 = vld [vmem:[%s1 + $0x50] sm:$0xff]
      %v277 = vld [vmem:[%s1 + $0x58] sm:$0xff]
      %v278 = vld [vmem:[%s1 + $0x60] sm:$0xff]
      %v279 = vld [vmem:[%s1 + $0x68] sm:$0xff]
      %v280 = vld [vmem:[%s1 + $0x70] sm:$0xff]
      %v281 = vld [vmem:[%s1 + $0x78] sm:$0xff]
      %282 = vmatprep.subr.mxu0 0.0
      %283 = vmatpush1.msra.mxu0 %v281
      %284 = vmatprep.subr.mxu0 0.0
      %285 = vmatpush1.msra.mxu0 %v280
      %286 = vmatprep.subr.mxu0 0.0
      %287 = vmatpush1.msra.mxu0 %v279
      %288 = vmatprep.subr.mxu0 0.0
      %289 = vmatpush1.msra.mxu0 %v278
      %290 = vmatprep.subr.mxu0 0.0
      %291 = vmatpush1.msra.mxu0 %v277
      %292 = vmatprep.subr.mxu0 0.0
      %293 = vmatpush1.msra.mxu0 %v276
      %294 = vmatprep.subr.mxu0 0.0
      %295 = vmatpush1.msra.mxu0 %v275
      %296 = vmatprep.subr.mxu0 0.0
      %297 = vmatpush1.msra.mxu0 %v274
      %298 = vmatprep.subr.mxu0 0.0
      %299 = vmatpush1.msra.mxu0 %v273
      %300 = vmatprep.subr.mxu0 0.0
      %301 = vmatpush1.msra.mxu0 %v272
      %302 = vmatprep.subr.mxu0 0.0
      %303 = vmatpush1.msra.mxu0 %v271
      %304 = vmatprep.subr.mxu0 0.0
      %305 = vmatpush1.msra.mxu0 %v270
      %306 = vmatprep.subr.mxu0 0.0
      %307 = vmatpush1.msra.mxu0 %v269
      %308 = vmatprep.subr.mxu0 0.0
      %309 = vmatpush1.msra.mxu0 %v268
      %310 = vmatprep.subr.mxu0 0.0
      %311 = vmatpush1.msra.mxu0 %v267
      %312 = vmatprep.subr.mxu0 0.0
      %313 = vmatpush1.msra.mxu0 %v266
      %314 = vmatprep.subr.mxu0 0.0
      %315 = vmatpush2.msra.mxu0 0.0
      %316 = vmatprep.subr.mxu0 0.0
      %317 = vmatpush2.msra.mxu0 0.0
      %318 = vmatprep.subr.mxu0 0.0
      %319 = vmatpush2.msra.mxu0 0.0
      %320 = vmatprep.subr.mxu0 0.0
      %321 = vmatpush2.msra.mxu0 0.0
      %322 = vmatprep.subr.mxu0 0.0
      %323 = vmatpush2.msra.mxu0 0.0
      %324 = vmatprep.subr.mxu0 0.0
      %325 = vmatpush2.msra.mxu0 0.0
      %326 = vmatprep.subr.mxu0 0.0
      %327 = vmatpush2.msra.mxu0 0.0
      %328 = vmatprep.subr.mxu0 0.0
      %329 = vmatpush2.msra.mxu0 0.0
      %330 = vmatprep.subr.mxu0 0.0
      %331 = vmatpush2.msra.mxu0 0.0
      %332 = vmatprep.subr.mxu0 0.0
      %333 = vmatpush2.msra.mxu0 0.0
      %334 = vmatprep.subr.mxu0 0.0
      %335 = vmatpush2.msra.mxu0 0.0
      %336 = vmatprep.subr.mxu0 0.0
      %337 = vmatpush2.msra.mxu0 0.0
      %338 = vmatprep.subr.mxu0 0.0
      %339 = vmatpush2.msra.mxu0 0.0
      %340 = vmatprep.subr.mxu0 0.0
      %341 = vmatpush2.msra.mxu0 0.0
      %342 = vmatprep.subr.mxu0 0.0
      %343 = vmatpush2.msra.mxu0 0.0
      %344 = vmatprep.subr.mxu0 0.0
      %345 = vmatpush2.msra.mxu0 0.0
      %346 = vmatprep.mubr.f32.mxu0 0.0
      %347 = vmatmul.mubr.f32.gmra.mxu0 %v234
      %v348 = vpop.f32.mrf.mxu0
      %v349 = vadd.f32 0.0, %v348
      %v350 = vpop.f32.mrf.mxu0
      %351 = vmatprep.mubr.f32.mxu0 0.0
      %352 = vmatmul.mubr.f32.gmra.mxu0 %v235
      %v353 = vpop.f32.mrf.mxu0
      %v354 = vadd.f32 0.0, %v353
      %v355 = vpop.f32.mrf.mxu0
      %356 = vmatprep.mubr.f32.mxu0 0.0
      %357 = vmatmul.mubr.f32.gmra.mxu0 %v236
      %v358 = vpop.f32.mrf.mxu0
      %v359 = vadd.f32 0.0, %v358
      %v360 = vpop.f32.mrf.mxu0
      %361 = vmatprep.mubr.f32.mxu0 0.0
      %362 = vmatmul.mubr.f32.gmra.mxu0 %v237
      %v363 = vpop.f32.mrf.mxu0
      %v364 = vadd.f32 0.0, %v363
      %v365 = vpop.f32.mrf.mxu0
      %366 = vmatprep.mubr.f32.mxu0 0.0
      %367 = vmatmul.mubr.f32.gmra.mxu0 %v238
      %v368 = vpop.f32.mrf.mxu0
      %v369 = vadd.f32 0.0, %v368
      %v370 = vpop.f32.mrf.mxu0
      %371 = vmatprep.mubr.f32.mxu0 0.0
      %372 = vmatmul.mubr.f32.gmra.mxu0 %v239
      %v373 = vpop.f32.mrf.mxu0
      %v374 = vadd.f32 0.0, %v373
      %v375 = vpop.f32.mrf.mxu0
      %376 = vmatprep.mubr.f32.mxu0 0.0
      %377 = vmatmul.mubr.f32.gmra.mxu0 %v240
      %v378 = vpop.f32.mrf.mxu0
      %v379 = vadd.f32 0.0, %v378
      %v380 = vpop.f32.mrf.mxu0
      %381 = vmatprep.mubr.f32.mxu0 0.0
      %382 = vmatmul.mubr.f32.gmra.mxu0 %v241
      %v383 = vpop.f32.mrf.mxu0
      %v384 = vadd.f32 0.0, %v383
      %v385 = vpop.f32.mrf.mxu0
      %386 = vmatprep.mubr.f32.mxu0 0.0
      %387 = vmatmul.mubr.f32.gmra.mxu0 %v242
      %v388 = vpop.f32.mrf.mxu0
      %v389 = vadd.f32 0.0, %v388
      %v390 = vpop.f32.mrf.mxu0
      %391 = vmatprep.mubr.f32.mxu0 0.0
      %392 = vmatmul.mubr.f32.gmra.mxu0 %v243
      %v393 = vpop.f32.mrf.mxu0
      %v394 = vadd.f32 0.0, %v393
      %v395 = vpop.f32.mrf.mxu0
      %396 = vmatprep.mubr.f32.mxu0 0.0
      %397 = vmatmul.mubr.f32.gmra.mxu0 %v244
      %v398 = vpop.f32.mrf.mxu0
      %v399 = vadd.f32 0.0, %v398
      %v400 = vpop.f32.mrf.mxu0
      %401 = vmatprep.mubr.f32.mxu0 0.0
      %402 = vmatmul.mubr.f32.gmra.mxu0 %v245
      %v403 = vpop.f32.mrf.mxu0
      %v404 = vadd.f32 0.0, %v403
      %v405 = vpop.f32.mrf.mxu0
      %406 = vmatprep.mubr.f32.mxu0 0.0
      %407 = vmatmul.mubr.f32.gmra.mxu0 %v246
      %v408 = vpop.f32.mrf.mxu0
      %v409 = vadd.f32 0.0, %v408
      %v410 = vpop.f32.mrf.mxu0
      %411 = vmatprep.mubr.f32.mxu0 0.0
      %412 = vmatmul.mubr.f32.gmra.mxu0 %v247
      %v413 = vpop.f32.mrf.mxu0
      %v414 = vadd.f32 0.0, %v413
      %v415 = vpop.f32.mrf.mxu0
      %416 = vmatprep.mubr.f32.mxu0 0.0
      %417 = vmatmul.mubr.f32.gmra.mxu0 %v248
      %v418 = vpop.f32.mrf.mxu0
      %v419 = vadd.f32 0.0, %v418
      %v420 = vpop.f32.mrf.mxu0
      %421 = vmatprep.mubr.f32.mxu0 0.0
      %422 = vmatmul.mubr.f32.gmra.mxu0 %v249
      %v423 = vpop.f32.mrf.mxu0
      %v424 = vadd.f32 0.0, %v423
      %v425 = vpop.f32.mrf.mxu0
      %426 = vmatprep.mubr.f32.mxu0 0.0
      %427 = vmatmul.mubr.f32.gmra.mxu0 %v250
      %v428 = vpop.f32.mrf.mxu0
      %v429 = vadd.f32 0.0, %v428
      %v430 = vpop.f32.mrf.mxu0
      %431 = vmatprep.mubr.f32.mxu0 0.0
      %432 = vmatmul.mubr.f32.gmra.mxu0 %v251
      %v433 = vpop.f32.mrf.mxu0
      %v434 = vadd.f32 0.0, %v433
      %v435 = vpop.f32.mrf.mxu0
      %436 = vmatprep.mubr.f32.mxu0 0.0
      %437 = vmatmul.mubr.f32.gmra.mxu0 %v252
      %v438 = vpop.f32.mrf.mxu0
      %v439 = vadd.f32 0.0, %v438
      %v440 = vpop.f32.mrf.mxu0
      %441 = vmatprep.mubr.f32.mxu0 0.0
      %442 = vmatmul.mubr.f32.gmra.mxu0 %v253
      %v443 = vpop.f32.mrf.mxu0
      %v444 = vadd.f32 0.0, %v443
      %v445 = vpop.f32.mrf.mxu0
      %446 = vmatprep.mubr.f32.mxu0 0.0
      %447 = vmatmul.mubr.f32.gmra.mxu0 %v254
      %v448 = vpop.f32.mrf.mxu0
      %v449 = vadd.f32 0.0, %v448
      %v450 = vpop.f32.mrf.mxu0
      %451 = vmatprep.mubr.f32.mxu0 0.0
      %452 = vmatmul.mubr.f32.gmra.mxu0 %v255
      %v453 = vpop.f32.mrf.mxu0
      %v454 = vadd.f32 0.0, %v453
      %v455 = vpop.f32.mrf.mxu0
      %456 = vmatprep.mubr.f32.mxu0 0.0
      %457 = vmatmul.mubr.f32.gmra.mxu0 %v256
      %v458 = vpop.f32.mrf.mxu0
      %v459 = vadd.f32 0.0, %v458
      %v460 = vpop.f32.mrf.mxu0
      %461 = vmatprep.mubr.f32.mxu0 0.0
      %462 = vmatmul.mubr.f32.gmra.mxu0 %v257
      %v463 = vpop.f32.mrf.mxu0
      %v464 = vadd.f32 0.0, %v463
      %v465 = vpop.f32.mrf.mxu0
      %466 = vmatprep.mubr.f32.mxu0 0.0
      %467 = vmatmul.mubr.f32.gmra.mxu0 %v258
      %v468 = vpop.f32.mrf.mxu0
      %v469 = vadd.f32 0.0, %v468
      %v470 = vpop.f32.mrf.mxu0
      %471 = vmatprep.mubr.f32.mxu0 0.0
      %472 = vmatmul.mubr.f32.gmra.mxu0 %v259
      %v473 = vpop.f32.mrf.mxu0
      %v474 = vadd.f32 0.0, %v473
      %v475 = vpop.f32.mrf.mxu0
      %476 = vmatprep.mubr.f32.mxu0 0.0
      %477 = vmatmul.mubr.f32.gmra.mxu0 %v260
      %v478 = vpop.f32.mrf.mxu0
      %v479 = vadd.f32 0.0, %v478
      %v480 = vpop.f32.mrf.mxu0
      %481 = vmatprep.mubr.f32.mxu0 0.0
      %482 = vmatmul.mubr.f32.gmra.mxu0 %v261
      %v483 = vpop.f32.mrf.mxu0
      %v484 = vadd.f32 0.0, %v483
      %v485 = vpop.f32.mrf.mxu0
      %486 = vmatprep.mubr.f32.mxu0 0.0
      %487 = vmatmul.mubr.f32.gmra.mxu0 %v262
      %v488 = vpop.f32.mrf.mxu0
      %v489 = vadd.f32 0.0, %v488
      %v490 = vpop.f32.mrf.mxu0
      %491 = vmatprep.mubr.f32.mxu0 0.0
      %492 = vmatmul.mubr.f32.gmra.mxu0 %v263
      %v493 = vpop.f32.mrf.mxu0
      %v494 = vadd.f32 0.0, %v493
      %v495 = vpop.f32.mrf.mxu0
      %496 = vmatprep.mubr.f32.mxu0 0.0
      %497 = vmatmul.mubr.f32.gmra.mxu0 %v264
      %v498 = vpop.f32.mrf.mxu0
      %v499 = vadd.f32 0.0, %v498
      %v500 = vpop.f32.mrf.mxu0
      %501 = vmatprep.mubr.f32.mxu0 0.0
      %502 = vmatmul.mubr.f32.gmra.mxu0 %v265
      %v503 = vpop.f32.mrf.mxu0
      %v504 = vadd.f32 0.0, %v503
      %v505 = vpop.f32.mrf.mxu0
      %506 = vdwg.mxu0
      %507 = vst [vmem:[%s225] sm:$0xff] %v349
      %508 = vst [vmem:[%s225 + $0x8] sm:$0xff] %v354
      %509 = vst [vmem:[%s225 + $0x40] sm:$0xff] %v359
      %510 = vst [vmem:[%s225 + $0x48] sm:$0xff] %v364
      %511 = vst [vmem:[%s225 + $0x80] sm:$0xff] %v369
      %512 = vst [vmem:[%s225 + $0x88] sm:$0xff] %v374
      %513 = vst [vmem:[%s225 + $0xc0] sm:$0xff] %v379
      %514 = vst [vmem:[%s225 + $0xc8] sm:$0xff] %v384
      %515 = vst [vmem:[%s225 + $0x100] sm:$0xff] %v389
      %516 = vst [vmem:[%s225 + $0x108] sm:$0xff] %v394
      %517 = vst [vmem:[%s225 + $0x140] sm:$0xff] %v399
      %518 = vst [vmem:[%s225 + $0x148] sm:$0xff] %v404
      %519 = vst [vmem:[%s225 + $0x180] sm:$0xff] %v409
      %520 = vst [vmem:[%s225 + $0x188] sm:$0xff] %v414
      %521 = vst [vmem:[%s225 + $0x1c0] sm:$0xff] %v419
      %522 = vst [vmem:[%s225 + $0x1c8] sm:$0xff] %v424
      %523 = vst [vmem:[%s225 + $0x200] sm:$0xff] %v429
      %524 = vst [vmem:[%s225 + $0x208] sm:$0xff] %v434
      %525 = vst [vmem:[%s225 + $0x240] sm:$0xff] %v439
      %526 = vst [vmem:[%s225 + $0x248] sm:$0xff] %v444
      %527 = vst [vmem:[%s225 + $0x280] sm:$0xff] %v449
      %528 = vst [vmem:[%s225 + $0x288] sm:$0xff] %v454
      %529 = vst [vmem:[%s225 + $0x2c0] sm:$0xff] %v459
      %530 = vst [vmem:[%s225 + $0x2c8] sm:$0xff] %v464
      %531 = vst [vmem:[%s225 + $0x300] sm:$0xff] %v469
      %532 = vst [vmem:[%s225 + $0x308] sm:$0xff] %v474
      %533 = vst [vmem:[%s225 + $0x340] sm:$0xff] %v479
      %534 = vst [vmem:[%s225 + $0x348] sm:$0xff] %v484
      %535 = vst [vmem:[%s225 + $0x380] sm:$0xff] %v489
      %536 = vst [vmem:[%s225 + $0x388] sm:$0xff] %v494
      %537 = vst [vmem:[%s225 + $0x3c0] sm:$0xff] %v499
      %538 = vst [vmem:[%s225 + $0x3c8] sm:$0xff] %v504
      %s539 = scalar_lea.vmem %s214, 16
      %v540 = vld [vmem:[%s539] sm:$0xff]
      %v541 = vld [vmem:[%s539 + $0x8] sm:$0xff]
      %v542 = vld [vmem:[%s539 + $0x40] sm:$0xff]
      %v543 = vld [vmem:[%s539 + $0x48] sm:$0xff]
      %v544 = vld [vmem:[%s539 + $0x80] sm:$0xff]
      %v545 = vld [vmem:[%s539 + $0x88] sm:$0xff]
      %v546 = vld [vmem:[%s539 + $0xc0] sm:$0xff]
      %v547 = vld [vmem:[%s539 + $0xc8] sm:$0xff]
      %v548 = vld [vmem:[%s539 + $0x100] sm:$0xff]
      %v549 = vld [vmem:[%s539 + $0x108] sm:$0xff]
      %v550 = vld [vmem:[%s539 + $0x140] sm:$0xff]
      %v551 = vld [vmem:[%s539 + $0x148] sm:$0xff]
      %v552 = vld [vmem:[%s539 + $0x180] sm:$0xff]
      %v553 = vld [vmem:[%s539 + $0x188] sm:$0xff]
      %v554 = vld [vmem:[%s539 + $0x1c0] sm:$0xff]
      %v555 = vld [vmem:[%s539 + $0x1c8] sm:$0xff]
      %v556 = vld [vmem:[%s539 + $0x200] sm:$0xff]
      %v557 = vld [vmem:[%s539 + $0x208] sm:$0xff]
      %v558 = vld [vmem:[%s539 + $0x240] sm:$0xff]
      %v559 = vld [vmem:[%s539 + $0x248] sm:$0xff]
      %v560 = vld [vmem:[%s539 + $0x280] sm:$0xff]
      %v561 = vld [vmem:[%s539 + $0x288] sm:$0xff]
      %v562 = vld [vmem:[%s539 + $0x2c0] sm:$0xff]
      %v563 = vld [vmem:[%s539 + $0x2c8] sm:$0xff]
      %v564 = vld [vmem:[%s539 + $0x300] sm:$0xff]
      %v565 = vld [vmem:[%s539 + $0x308] sm:$0xff]
      %v566 = vld [vmem:[%s539 + $0x340] sm:$0xff]
      %v567 = vld [vmem:[%s539 + $0x348] sm:$0xff]
      %v568 = vld [vmem:[%s539 + $0x380] sm:$0xff]
      %v569 = vld [vmem:[%s539 + $0x388] sm:$0xff]
      %v570 = vld [vmem:[%s539 + $0x3c0] sm:$0xff]
      %v571 = vld [vmem:[%s539 + $0x3c8] sm:$0xff]
      %s572 = scalar_lea.vmem %s1, 128
      %v573 = vld [vmem:[%s572] sm:$0xff]
      %v574 = vld [vmem:[%s572 + $0x8] sm:$0xff]
      %v575 = vld [vmem:[%s572 + $0x10] sm:$0xff]
      %v576 = vld [vmem:[%s572 + $0x18] sm:$0xff]
      %v577 = vld [vmem:[%s572 + $0x20] sm:$0xff]
      %v578 = vld [vmem:[%s572 + $0x28] sm:$0xff]
      %v579 = vld [vmem:[%s572 + $0x30] sm:$0xff]
      %v580 = vld [vmem:[%s572 + $0x38] sm:$0xff]
      %v581 = vld [vmem:[%s572 + $0x40] sm:$0xff]
      %v582 = vld [vmem:[%s572 + $0x48] sm:$0xff]
      %v583 = vld [vmem:[%s572 + $0x50] sm:$0xff]
      %v584 = vld [vmem:[%s572 + $0x58] sm:$0xff]
      %v585 = vld [vmem:[%s572 + $0x60] sm:$0xff]
      %v586 = vld [vmem:[%s572 + $0x68] sm:$0xff]
      %v587 = vld [vmem:[%s572 + $0x70] sm:$0xff]
      %v588 = vld [vmem:[%s572 + $0x78] sm:$0xff]
      %589 = vmatprep.subr.mxu0 0.0
      %590 = vmatpush1.msra.mxu0 %v588
      %591 = vmatprep.subr.mxu0 0.0
      %592 = vmatpush1.msra.mxu0 %v587
      %593 = vmatprep.subr.mxu0 0.0
      %594 = vmatpush1.msra.mxu0 %v586
      %595 = vmatprep.subr.mxu0 0.0
      %596 = vmatpush1.msra.mxu0 %v585
      %597 = vmatprep.subr.mxu0 0.0
      %598 = vmatpush1.msra.mxu0 %v584
      %599 = vmatprep.subr.mxu0 0.0
      %600 = vmatpush1.msra.mxu0 %v583
      %601 = vmatprep.subr.mxu0 0.0
      %602 = vmatpush1.msra.mxu0 %v582
      %603 = vmatprep.subr.mxu0 0.0
      %604 = vmatpush1.msra.mxu0 %v581
      %605 = vmatprep.subr.mxu0 0.0
      %606 = vmatpush1.msra.mxu0 %v580
      %607 = vmatprep.subr.mxu0 0.0
      %608 = vmatpush1.msra.mxu0 %v579
      %609 = vmatprep.subr.mxu0 0.0
      %610 = vmatpush1.msra.mxu0 %v578
      %611 = vmatprep.subr.mxu0 0.0
      %612 = vmatpush1.msra.mxu0 %v577
      %613 = vmatprep.subr.mxu0 0.0
      %614 = vmatpush1.msra.mxu0 %v576
      %615 = vmatprep.subr.mxu0 0.0
      %616 = vmatpush1.msra.mxu0 %v575
      %617 = vmatprep.subr.mxu0 0.0
      %618 = vmatpush1.msra.mxu0 %v574
      %619 = vmatprep.subr.mxu0 0.0
      %620 = vmatpush1.msra.mxu0 %v573
      %621 = vmatprep.subr.mxu0 0.0
      %622 = vmatpush2.msra.mxu0 0.0
      %623 = vmatprep.subr.mxu0 0.0
      %624 = vmatpush2.msra.mxu0 0.0
      %625 = vmatprep.subr.mxu0 0.0
      %626 = vmatpush2.msra.mxu0 0.0
      %627 = vmatprep.subr.mxu0 0.0
      %628 = vmatpush2.msra.mxu0 0.0
      %629 = vmatprep.subr.mxu0 0.0
      %630 = vmatpush2.msra.mxu0 0.0
      %631 = vmatprep.subr.mxu0 0.0
      %632 = vmatpush2.msra.mxu0 0.0
      %633 = vmatprep.subr.mxu0 0.0
      %634 = vmatpush2.msra.mxu0 0.0
      %635 = vmatprep.subr.mxu0 0.0
      %636 = vmatpush2.msra.mxu0 0.0
      %637 = vmatprep.subr.mxu0 0.0
      %638 = vmatpush2.msra.mxu0 0.0
      %639 = vmatprep.subr.mxu0 0.0
      %640 = vmatpush2.msra.mxu0 0.0
      %641 = vmatprep.subr.mxu0 0.0
      %642 = vmatpush2.msra.mxu0 0.0
      %643 = vmatprep.subr.mxu0 0.0
      %644 = vmatpush2.msra.mxu0 0.0
      %645 = vmatprep.subr.mxu0 0.0
      %646 = vmatpush2.msra.mxu0 0.0
      %647 = vmatprep.subr.mxu0 0.0
      %648 = vmatpush2.msra.mxu0 0.0
      %649 = vmatprep.subr.mxu0 0.0
      %650 = vmatpush2.msra.mxu0 0.0
      %651 = vmatprep.subr.mxu0 0.0
      %652 = vmatpush2.msra.mxu0 0.0
      %653 = vmatprep.mubr.f32.mxu0 0.0
      %654 = vmatmul.mubr.f32.gmra.mxu0 %v540
      %v655 = vpop.f32.mrf.mxu0
      %v656 = vadd.f32 0.0, %v655
      %v657 = vpop.f32.mrf.mxu0
      %658 = vmatprep.mubr.f32.mxu0 0.0
      %659 = vmatmul.mubr.f32.gmra.mxu0 %v541
      %v660 = vpop.f32.mrf.mxu0
      %v661 = vadd.f32 0.0, %v660
      %v662 = vpop.f32.mrf.mxu0
      %663 = vmatprep.mubr.f32.mxu0 0.0
      %664 = vmatmul.mubr.f32.gmra.mxu0 %v542
      %v665 = vpop.f32.mrf.mxu0
      %v666 = vadd.f32 0.0, %v665
      %v667 = vpop.f32.mrf.mxu0
      %668 = vmatprep.mubr.f32.mxu0 0.0
      %669 = vmatmul.mubr.f32.gmra.mxu0 %v543
      %v670 = vpop.f32.mrf.mxu0
      %v671 = vadd.f32 0.0, %v670
      %v672 = vpop.f32.mrf.mxu0
      %673 = vmatprep.mubr.f32.mxu0 0.0
      %674 = vmatmul.mubr.f32.gmra.mxu0 %v544
      %v675 = vpop.f32.mrf.mxu0
      %v676 = vadd.f32 0.0, %v675
      %v677 = vpop.f32.mrf.mxu0
      %678 = vmatprep.mubr.f32.mxu0 0.0
      %679 = vmatmul.mubr.f32.gmra.mxu0 %v545
      %v680 = vpop.f32.mrf.mxu0
      %v681 = vadd.f32 0.0, %v680
      %v682 = vpop.f32.mrf.mxu0
      %683 = vmatprep.mubr.f32.mxu0 0.0
      %684 = vmatmul.mubr.f32.gmra.mxu0 %v546
      %v685 = vpop.f32.mrf.mxu0
      %v686 = vadd.f32 0.0, %v685
      %v687 = vpop.f32.mrf.mxu0
      %688 = vmatprep.mubr.f32.mxu0 0.0
      %689 = vmatmul.mubr.f32.gmra.mxu0 %v547
      %v690 = vpop.f32.mrf.mxu0
      %v691 = vadd.f32 0.0, %v690
      %v692 = vpop.f32.mrf.mxu0
      %693 = vmatprep.mubr.f32.mxu0 0.0
      %694 = vmatmul.mubr.f32.gmra.mxu0 %v548
      %v695 = vpop.f32.mrf.mxu0
      %v696 = vadd.f32 0.0, %v695
      %v697 = vpop.f32.mrf.mxu0
      %698 = vmatprep.mubr.f32.mxu0 0.0
      %699 = vmatmul.mubr.f32.gmra.mxu0 %v549
      %v700 = vpop.f32.mrf.mxu0
      %v701 = vadd.f32 0.0, %v700
      %v702 = vpop.f32.mrf.mxu0
      %703 = vmatprep.mubr.f32.mxu0 0.0
      %704 = vmatmul.mubr.f32.gmra.mxu0 %v550
      %v705 = vpop.f32.mrf.mxu0
      %v706 = vadd.f32 0.0, %v705
      %v707 = vpop.f32.mrf.mxu0
      %708 = vmatprep.mubr.f32.mxu0 0.0
      %709 = vmatmul.mubr.f32.gmra.mxu0 %v551
      %v710 = vpop.f32.mrf.mxu0
      %v711 = vadd.f32 0.0, %v710
      %v712 = vpop.f32.mrf.mxu0
      %713 = vmatprep.mubr.f32.mxu0 0.0
      %714 = vmatmul.mubr.f32.gmra.mxu0 %v552
      %v715 = vpop.f32.mrf.mxu0
      %v716 = vadd.f32 0.0, %v715
      %v717 = vpop.f32.mrf.mxu0
      %718 = vmatprep.mubr.f32.mxu0 0.0
      %719 = vmatmul.mubr.f32.gmra.mxu0 %v553
      %v720 = vpop.f32.mrf.mxu0
      %v721 = vadd.f32 0.0, %v720
      %v722 = vpop.f32.mrf.mxu0
      %723 = vmatprep.mubr.f32.mxu0 0.0
      %724 = vmatmul.mubr.f32.gmra.mxu0 %v554
      %v725 = vpop.f32.mrf.mxu0
      %v726 = vadd.f32 0.0, %v725
      %v727 = vpop.f32.mrf.mxu0
      %728 = vmatprep.mubr.f32.mxu0 0.0
      %729 = vmatmul.mubr.f32.gmra.mxu0 %v555
      %v730 = vpop.f32.mrf.mxu0
      %v731 = vadd.f32 0.0, %v730
      %v732 = vpop.f32.mrf.mxu0
      %733 = vmatprep.mubr.f32.mxu0 0.0
      %734 = vmatmul.mubr.f32.gmra.mxu0 %v556
      %v735 = vpop.f32.mrf.mxu0
      %v736 = vadd.f32 0.0, %v735
      %v737 = vpop.f32.mrf.mxu0
      %738 = vmatprep.mubr.f32.mxu0 0.0
      %739 = vmatmul.mubr.f32.gmra.mxu0 %v557
      %v740 = vpop.f32.mrf.mxu0
      %v741 = vadd.f32 0.0, %v740
      %v742 = vpop.f32.mrf.mxu0
      %743 = vmatprep.mubr.f32.mxu0 0.0
      %744 = vmatmul.mubr.f32.gmra.mxu0 %v558
      %v745 = vpop.f32.mrf.mxu0
      %v746 = vadd.f32 0.0, %v745
      %v747 = vpop.f32.mrf.mxu0
      %748 = vmatprep.mubr.f32.mxu0 0.0
      %749 = vmatmul.mubr.f32.gmra.mxu0 %v559
      %v750 = vpop.f32.mrf.mxu0
      %v751 = vadd.f32 0.0, %v750
      %v752 = vpop.f32.mrf.mxu0
      %753 = vmatprep.mubr.f32.mxu0 0.0
      %754 = vmatmul.mubr.f32.gmra.mxu0 %v560
      %v755 = vpop.f32.mrf.mxu0
      %v756 = vadd.f32 0.0, %v755
      %v757 = vpop.f32.mrf.mxu0
      %758 = vmatprep.mubr.f32.mxu0 0.0
      %759 = vmatmul.mubr.f32.gmra.mxu0 %v561
      %v760 = vpop.f32.mrf.mxu0
      %v761 = vadd.f32 0.0, %v760
      %v762 = vpop.f32.mrf.mxu0
      %763 = vmatprep.mubr.f32.mxu0 0.0
      %764 = vmatmul.mubr.f32.gmra.mxu0 %v562
      %v765 = vpop.f32.mrf.mxu0
      %v766 = vadd.f32 0.0, %v765
      %v767 = vpop.f32.mrf.mxu0
      %768 = vmatprep.mubr.f32.mxu0 0.0
      %769 = vmatmul.mubr.f32.gmra.mxu0 %v563
      %v770 = vpop.f32.mrf.mxu0
      %v771 = vadd.f32 0.0, %v770
      %v772 = vpop.f32.mrf.mxu0
      %773 = vmatprep.mubr.f32.mxu0 0.0
      %774 = vmatmul.mubr.f32.gmra.mxu0 %v564
      %v775 = vpop.f32.mrf.mxu0
      %v776 = vadd.f32 0.0, %v775
      %v777 = vpop.f32.mrf.mxu0
      %778 = vmatprep.mubr.f32.mxu0 0.0
      %779 = vmatmul.mubr.f32.gmra.mxu0 %v565
      %v780 = vpop.f32.mrf.mxu0
      %v781 = vadd.f32 0.0, %v780
      %v782 = vpop.f32.mrf.mxu0
      %783 = vmatprep.mubr.f32.mxu0 0.0
      %784 = vmatmul.mubr.f32.gmra.mxu0 %v566
      %v785 = vpop.f32.mrf.mxu0
      %v786 = vadd.f32 0.0, %v785
      %v787 = vpop.f32.mrf.mxu0
      %788 = vmatprep.mubr.f32.mxu0 0.0
      %789 = vmatmul.mubr.f32.gmra.mxu0 %v567
      %v790 = vpop.f32.mrf.mxu0
      %v791 = vadd.f32 0.0, %v790
      %v792 = vpop.f32.mrf.mxu0
      %793 = vmatprep.mubr.f32.mxu0 0.0
      %794 = vmatmul.mubr.f32.gmra.mxu0 %v568
      %v795 = vpop.f32.mrf.mxu0
      %v796 = vadd.f32 0.0, %v795
      %v797 = vpop.f32.mrf.mxu0
      %798 = vmatprep.mubr.f32.mxu0 0.0
      %799 = vmatmul.mubr.f32.gmra.mxu0 %v569
      %v800 = vpop.f32.mrf.mxu0
      %v801 = vadd.f32 0.0, %v800
      %v802 = vpop.f32.mrf.mxu0
      %803 = vmatprep.mubr.f32.mxu0 0.0
      %804 = vmatmul.mubr.f32.gmra.mxu0 %v570
      %v805 = vpop.f32.mrf.mxu0
      %v806 = vadd.f32 0.0, %v805
      %v807 = vpop.f32.mrf.mxu0
      %808 = vmatprep.mubr.f32.mxu0 0.0
      %809 = vmatmul.mubr.f32.gmra.mxu0 %v571
      %v810 = vpop.f32.mrf.mxu0
      %v811 = vadd.f32 0.0, %v810
      %v812 = vpop.f32.mrf.mxu0
      %813 = vdwg.mxu0
      %s814 = scalar_lea.vmem %s225, 16
      %815 = vst [vmem:[%s814] sm:$0xff] %v656
      %816 = vst [vmem:[%s814 + $0x8] sm:$0xff] %v661
      %817 = vst [vmem:[%s814 + $0x40] sm:$0xff] %v666
      %818 = vst [vmem:[%s814 + $0x48] sm:$0xff] %v671
      %819 = vst [vmem:[%s814 + $0x80] sm:$0xff] %v676
      %820 = vst [vmem:[%s814 + $0x88] sm:$0xff] %v681
      %821 = vst [vmem:[%s814 + $0xc0] sm:$0xff] %v686
      %822 = vst [vmem:[%s814 + $0xc8] sm:$0xff] %v691
      %823 = vst [vmem:[%s814 + $0x100] sm:$0xff] %v696
      %824 = vst [vmem:[%s814 + $0x108] sm:$0xff] %v701
      %825 = vst [vmem:[%s814 + $0x140] sm:$0xff] %v706
      %826 = vst [vmem:[%s814 + $0x148] sm:$0xff] %v711
      %827 = vst [vmem:[%s814 + $0x180] sm:$0xff] %v716
      %828 = vst [vmem:[%s814 + $0x188] sm:$0xff] %v721
      %829 = vst [vmem:[%s814 + $0x1c0] sm:$0xff] %v726
      %830 = vst [vmem:[%s814 + $0x1c8] sm:$0xff] %v731
      %831 = vst [vmem:[%s814 + $0x200] sm:$0xff] %v736
      %832 = vst [vmem:[%s814 + $0x208] sm:$0xff] %v741
      %833 = vst [vmem:[%s814 + $0x240] sm:$0xff] %v746
      %834 = vst [vmem:[%s814 + $0x248] sm:$0xff] %v751
      %835 = vst [vmem:[%s814 + $0x280] sm:$0xff] %v756
      %836 = vst [vmem:[%s814 + $0x288] sm:$0xff] %v761
      %837 = vst [vmem:[%s814 + $0x2c0] sm:$0xff] %v766
      %838 = vst [vmem:[%s814 + $0x2c8] sm:$0xff] %v771
      %839 = vst [vmem:[%s814 + $0x300] sm:$0xff] %v776
      %840 = vst [vmem:[%s814 + $0x308] sm:$0xff] %v781
      %841 = vst [vmem:[%s814 + $0x340] sm:$0xff] %v786
      %842 = vst [vmem:[%s814 + $0x348] sm:$0xff] %v791
      %843 = vst [vmem:[%s814 + $0x380] sm:$0xff] %v796
      %844 = vst [vmem:[%s814 + $0x388] sm:$0xff] %v801
      %845 = vst [vmem:[%s814 + $0x3c0] sm:$0xff] %v806
      %846 = vst [vmem:[%s814 + $0x3c8] sm:$0xff] %v811
      %s847 = scalar_lea.vmem %s214, 32
      %v848 = vld [vmem:[%s847] sm:$0xff]
      %v849 = vld [vmem:[%s847 + $0x8] sm:$0xff]
      %v850 = vld [vmem:[%s847 + $0x40] sm:$0xff]
      %v851 = vld [vmem:[%s847 + $0x48] sm:$0xff]
      %v852 = vld [vmem:[%s847 + $0x80] sm:$0xff]
      %v853 = vld [vmem:[%s847 + $0x88] sm:$0xff]
      %v854 = vld [vmem:[%s847 + $0xc0] sm:$0xff]
      %v855 = vld [vmem:[%s847 + $0xc8] sm:$0xff]
      %v856 = vld [vmem:[%s847 + $0x100] sm:$0xff]
      %v857 = vld [vmem:[%s847 + $0x108] sm:$0xff]
      %v858 = vld [vmem:[%s847 + $0x140] sm:$0xff]
      %v859 = vld [vmem:[%s847 + $0x148] sm:$0xff]
      %v860 = vld [vmem:[%s847 + $0x180] sm:$0xff]
      %v861 = vld [vmem:[%s847 + $0x188] sm:$0xff]
      %v862 = vld [vmem:[%s847 + $0x1c0] sm:$0xff]
      %v863 = vld [vmem:[%s847 + $0x1c8] sm:$0xff]
      %v864 = vld [vmem:[%s847 + $0x200] sm:$0xff]
      %v865 = vld [vmem:[%s847 + $0x208] sm:$0xff]
      %v866 = vld [vmem:[%s847 + $0x240] sm:$0xff]
      %v867 = vld [vmem:[%s847 + $0x248] sm:$0xff]
      %v868 = vld [vmem:[%s847 + $0x280] sm:$0xff]
      %v869 = vld [vmem:[%s847 + $0x288] sm:$0xff]
      %v870 = vld [vmem:[%s847 + $0x2c0] sm:$0xff]
      %v871 = vld [vmem:[%s847 + $0x2c8] sm:$0xff]
      %v872 = vld [vmem:[%s847 + $0x300] sm:$0xff]
      %v873 = vld [vmem:[%s847 + $0x308] sm:$0xff]
      %v874 = vld [vmem:[%s847 + $0x340] sm:$0xff]
      %v875 = vld [vmem:[%s847 + $0x348] sm:$0xff]
      %v876 = vld [vmem:[%s847 + $0x380] sm:$0xff]
      %v877 = vld [vmem:[%s847 + $0x388] sm:$0xff]
      %v878 = vld [vmem:[%s847 + $0x3c0] sm:$0xff]
      %v879 = vld [vmem:[%s847 + $0x3c8] sm:$0xff]
      %s880 = scalar_lea.vmem %s1, 256
      %v881 = vld [vmem:[%s880] sm:$0xff]
      %v882 = vld [vmem:[%s880 + $0x8] sm:$0xff]
      %v883 = vld [vmem:[%s880 + $0x10] sm:$0xff]
      %v884 = vld [vmem:[%s880 + $0x18] sm:$0xff]
      %v885 = vld [vmem:[%s880 + $0x20] sm:$0xff]
      %v886 = vld [vmem:[%s880 + $0x28] sm:$0xff]
      %v887 = vld [vmem:[%s880 + $0x30] sm:$0xff]
      %v888 = vld [vmem:[%s880 + $0x38] sm:$0xff]
      %v889 = vld [vmem:[%s880 + $0x40] sm:$0xff]
      %v890 = vld [vmem:[%s880 + $0x48] sm:$0xff]
      %v891 = vld [vmem:[%s880 + $0x50] sm:$0xff]
      %v892 = vld [vmem:[%s880 + $0x58] sm:$0xff]
      %v893 = vld [vmem:[%s880 + $0x60] sm:$0xff]
      %v894 = vld [vmem:[%s880 + $0x68] sm:$0xff]
      %v895 = vld [vmem:[%s880 + $0x70] sm:$0xff]
      %v896 = vld [vmem:[%s880 + $0x78] sm:$0xff]
      %897 = vmatprep.subr.mxu0 0.0
      %898 = vmatpush1.msra.mxu0 %v896
      %899 = vmatprep.subr.mxu0 0.0
      %900 = vmatpush1.msra.mxu0 %v895
      %901 = vmatprep.subr.mxu0 0.0
      %902 = vmatpush1.msra.mxu0 %v894
      %903 = vmatprep.subr.mxu0 0.0
      %904 = vmatpush1.msra.mxu0 %v893
      %905 = vmatprep.subr.mxu0 0.0
      %906 = vmatpush1.msra.mxu0 %v892
      %907 = vmatprep.subr.mxu0 0.0
      %908 = vmatpush1.msra.mxu0 %v891
      %909 = vmatprep.subr.mxu0 0.0
      %910 = vmatpush1.msra.mxu0 %v890
      %911 = vmatprep.subr.mxu0 0.0
      %912 = vmatpush1.msra.mxu0 %v889
      %913 = vmatprep.subr.mxu0 0.0
      %914 = vmatpush1.msra.mxu0 %v888
      %915 = vmatprep.subr.mxu0 0.0
      %916 = vmatpush1.msra.mxu0 %v887
      %917 = vmatprep.subr.mxu0 0.0
      %918 = vmatpush1.msra.mxu0 %v886
      %919 = vmatprep.subr.mxu0 0.0
      %920 = vmatpush1.msra.mxu0 %v885
      %921 = vmatprep.subr.mxu0 0.0
      %922 = vmatpush1.msra.mxu0 %v884
      %923 = vmatprep.subr.mxu0 0.0
      %924 = vmatpush1.msra.mxu0 %v883
      %925 = vmatprep.subr.mxu0 0.0
      %926 = vmatpush1.msra.mxu0 %v882
      %927 = vmatprep.subr.mxu0 0.0
      %928 = vmatpush1.msra.mxu0 %v881
      %929 = vmatprep.subr.mxu0 0.0
      %930 = vmatpush2.msra.mxu0 0.0
      %931 = vmatprep.subr.mxu0 0.0
      %932 = vmatpush2.msra.mxu0 0.0
      %933 = vmatprep.subr.mxu0 0.0
      %934 = vmatpush2.msra.mxu0 0.0
      %935 = vmatprep.subr.mxu0 0.0
      %936 = vmatpush2.msra.mxu0 0.0
      %937 = vmatprep.subr.mxu0 0.0
      %938 = vmatpush2.msra.mxu0 0.0
      %939 = vmatprep.subr.mxu0 0.0
      %940 = vmatpush2.msra.mxu0 0.0
      %941 = vmatprep.subr.mxu0 0.0
      %942 = vmatpush2.msra.mxu0 0.0
      %943 = vmatprep.subr.mxu0 0.0
      %944 = vmatpush2.msra.mxu0 0.0
      %945 = vmatprep.subr.mxu0 0.0
      %946 = vmatpush2.msra.mxu0 0.0
      %947 = vmatprep.subr.mxu0 0.0
      %948 = vmatpush2.msra.mxu0 0.0
      %949 = vmatprep.subr.mxu0 0.0
      %950 = vmatpush2.msra.mxu0 0.0
      %951 = vmatprep.subr.mxu0 0.0
      %952 = vmatpush2.msra.mxu0 0.0
      %953 = vmatprep.subr.mxu0 0.0
      %954 = vmatpush2.msra.mxu0 0.0
      %955 = vmatprep.subr.mxu0 0.0
      %956 = vmatpush2.msra.mxu0 0.0
      %957 = vmatprep.subr.mxu0 0.0
      %958 = vmatpush2.msra.mxu0 0.0
      %959 = vmatprep.subr.mxu0 0.0
      %960 = vmatpush2.msra.mxu0 0.0
      %961 = vmatprep.mubr.f32.mxu0 0.0
      %962 = vmatmul.mubr.f32.gmra.mxu0 %v848
      %v963 = vpop.f32.mrf.mxu0
      %v964 = vadd.f32 0.0, %v963
      %v965 = vpop.f32.mrf.mxu0
      %966 = vmatprep.mubr.f32.mxu0 0.0
      %967 = vmatmul.mubr.f32.gmra.mxu0 %v849
      %v968 = vpop.f32.mrf.mxu0
      %v969 = vadd.f32 0.0, %v968
      %v970 = vpop.f32.mrf.mxu0
      %971 = vmatprep.mubr.f32.mxu0 0.0
      %972 = vmatmul.mubr.f32.gmra.mxu0 %v850
      %v973 = vpop.f32.mrf.mxu0
      %v974 = vadd.f32 0.0, %v973
      %v975 = vpop.f32.mrf.mxu0
      %976 = vmatprep.mubr.f32.mxu0 0.0
      %977 = vmatmul.mubr.f32.gmra.mxu0 %v851
      %v978 = vpop.f32.mrf.mxu0
      %v979 = vadd.f32 0.0, %v978
      %v980 = vpop.f32.mrf.mxu0
      %981 = vmatprep.mubr.f32.mxu0 0.0
      %982 = vmatmul.mubr.f32.gmra.mxu0 %v852
      %v983 = vpop.f32.mrf.mxu0
      %v984 = vadd.f32 0.0, %v983
      %v985 = vpop.f32.mrf.mxu0
      %986 = vmatprep.mubr.f32.mxu0 0.0
      %987 = vmatmul.mubr.f32.gmra.mxu0 %v853
      %v988 = vpop.f32.mrf.mxu0
      %v989 = vadd.f32 0.0, %v988
      %v990 = vpop.f32.mrf.mxu0
      %991 = vmatprep.mubr.f32.mxu0 0.0
      %992 = vmatmul.mubr.f32.gmra.mxu0 %v854
      %v993 = vpop.f32.mrf.mxu0
      %v994 = vadd.f32 0.0, %v993
      %v995 = vpop.f32.mrf.mxu0
      %996 = vmatprep.mubr.f32.mxu0 0.0
      %997 = vmatmul.mubr.f32.gmra.mxu0 %v855
      %v998 = vpop.f32.mrf.mxu0
      %v999 = vadd.f32 0.0, %v998
      %v1000 = vpop.f32.mrf.mxu0
      %1001 = vmatprep.mubr.f32.mxu0 0.0
      %1002 = vmatmul.mubr.f32.gmra.mxu0 %v856
      %v1003 = vpop.f32.mrf.mxu0
      %v1004 = vadd.f32 0.0, %v1003
      %v1005 = vpop.f32.mrf.mxu0
      %1006 = vmatprep.mubr.f32.mxu0 0.0
      %1007 = vmatmul.mubr.f32.gmra.mxu0 %v857
      %v1008 = vpop.f32.mrf.mxu0
      %v1009 = vadd.f32 0.0, %v1008
      %v1010 = vpop.f32.mrf.mxu0
      %1011 = vmatprep.mubr.f32.mxu0 0.0
      %1012 = vmatmul.mubr.f32.gmra.mxu0 %v858
      %v1013 = vpop.f32.mrf.mxu0
      %v1014 = vadd.f32 0.0, %v1013
      %v1015 = vpop.f32.mrf.mxu0
      %1016 = vmatprep.mubr.f32.mxu0 0.0
      %1017 = vmatmul.mubr.f32.gmra.mxu0 %v859
      %v1018 = vpop.f32.mrf.mxu0
      %v1019 = vadd.f32 0.0, %v1018
      %v1020 = vpop.f32.mrf.mxu0
      %1021 = vmatprep.mubr.f32.mxu0 0.0
      %1022 = vmatmul.mubr.f32.gmra.mxu0 %v860
      %v1023 = vpop.f32.mrf.mxu0
      %v1024 = vadd.f32 0.0, %v1023
      %v1025 = vpop.f32.mrf.mxu0
      %1026 = vmatprep.mubr.f32.mxu0 0.0
      %1027 = vmatmul.mubr.f32.gmra.mxu0 %v861
      %v1028 = vpop.f32.mrf.mxu0
      %v1029 = vadd.f32 0.0, %v1028
      %v1030 = vpop.f32.mrf.mxu0
      %1031 = vmatprep.mubr.f32.mxu0 0.0
      %1032 = vmatmul.mubr.f32.gmra.mxu0 %v862
      %v1033 = vpop.f32.mrf.mxu0
      %v1034 = vadd.f32 0.0, %v1033
      %v1035 = vpop.f32.mrf.mxu0
      %1036 = vmatprep.mubr.f32.mxu0 0.0
      %1037 = vmatmul.mubr.f32.gmra.mxu0 %v863
      %v1038 = vpop.f32.mrf.mxu0
      %v1039 = vadd.f32 0.0, %v1038
      %v1040 = vpop.f32.mrf.mxu0
      %1041 = vmatprep.mubr.f32.mxu0 0.0
      %1042 = vmatmul.mubr.f32.gmra.mxu0 %v864
      %v1043 = vpop.f32.mrf.mxu0
      %v1044 = vadd.f32 0.0, %v1043
      %v1045 = vpop.f32.mrf.mxu0
      %1046 = vmatprep.mubr.f32.mxu0 0.0
      %1047 = vmatmul.mubr.f32.gmra.mxu0 %v865
      %v1048 = vpop.f32.mrf.mxu0
      %v1049 = vadd.f32 0.0, %v1048
      %v1050 = vpop.f32.mrf.mxu0
      %1051 = vmatprep.mubr.f32.mxu0 0.0
      %1052 = vmatmul.mubr.f32.gmra.mxu0 %v866
      %v1053 = vpop.f32.mrf.mxu0
      %v1054 = vadd.f32 0.0, %v1053
      %v1055 = vpop.f32.mrf.mxu0
      %1056 = vmatprep.mubr.f32.mxu0 0.0
      %1057 = vmatmul.mubr.f32.gmra.mxu0 %v867
      %v1058 = vpop.f32.mrf.mxu0
      %v1059 = vadd.f32 0.0, %v1058
      %v1060 = vpop.f32.mrf.mxu0
      %1061 = vmatprep.mubr.f32.mxu0 0.0
      %1062 = vmatmul.mubr.f32.gmra.mxu0 %v868
      %v1063 = vpop.f32.mrf.mxu0
      %v1064 = vadd.f32 0.0, %v1063
      %v1065 = vpop.f32.mrf.mxu0
      %1066 = vmatprep.mubr.f32.mxu0 0.0
      %1067 = vmatmul.mubr.f32.gmra.mxu0 %v869
      %v1068 = vpop.f32.mrf.mxu0
      %v1069 = vadd.f32 0.0, %v1068
      %v1070 = vpop.f32.mrf.mxu0
      %1071 = vmatprep.mubr.f32.mxu0 0.0
      %1072 = vmatmul.mubr.f32.gmra.mxu0 %v870
      %v1073 = vpop.f32.mrf.mxu0
      %v1074 = vadd.f32 0.0, %v1073
      %v1075 = vpop.f32.mrf.mxu0
      %1076 = vmatprep.mubr.f32.mxu0 0.0
      %1077 = vmatmul.mubr.f32.gmra.mxu0 %v871
      %v1078 = vpop.f32.mrf.mxu0
      %v1079 = vadd.f32 0.0, %v1078
      %v1080 = vpop.f32.mrf.mxu0
      %1081 = vmatprep.mubr.f32.mxu0 0.0
      %1082 = vmatmul.mubr.f32.gmra.mxu0 %v872
      %v1083 = vpop.f32.mrf.mxu0
      %v1084 = vadd.f32 0.0, %v1083
      %v1085 = vpop.f32.mrf.mxu0
      %1086 = vmatprep.mubr.f32.mxu0 0.0
      %1087 = vmatmul.mubr.f32.gmra.mxu0 %v873
      %v1088 = vpop.f32.mrf.mxu0
      %v1089 = vadd.f32 0.0, %v1088
      %v1090 = vpop.f32.mrf.mxu0
      %1091 = vmatprep.mubr.f32.mxu0 0.0
      %1092 = vmatmul.mubr.f32.gmra.mxu0 %v874
      %v1093 = vpop.f32.mrf.mxu0
      %v1094 = vadd.f32 0.0, %v1093
      %v1095 = vpop.f32.mrf.mxu0
      %1096 = vmatprep.mubr.f32.mxu0 0.0
      %1097 = vmatmul.mubr.f32.gmra.mxu0 %v875
      %v1098 = vpop.f32.mrf.mxu0
      %v1099 = vadd.f32 0.0, %v1098
      %v1100 = vpop.f32.mrf.mxu0
      %1101 = vmatprep.mubr.f32.mxu0 0.0
      %1102 = vmatmul.mubr.f32.gmra.mxu0 %v876
      %v1103 = vpop.f32.mrf.mxu0
      %v1104 = vadd.f32 0.0, %v1103
      %v1105 = vpop.f32.mrf.mxu0
      %1106 = vmatprep.mubr.f32.mxu0 0.0
      %1107 = vmatmul.mubr.f32.gmra.mxu0 %v877
      %v1108 = vpop.f32.mrf.mxu0
      %v1109 = vadd.f32 0.0, %v1108
      %v1110 = vpop.f32.mrf.mxu0
      %1111 = vmatprep.mubr.f32.mxu0 0.0
      %1112 = vmatmul.mubr.f32.gmra.mxu0 %v878
      %v1113 = vpop.f32.mrf.mxu0
      %v1114 = vadd.f32 0.0, %v1113
      %v1115 = vpop.f32.mrf.mxu0
      %1116 = vmatprep.mubr.f32.mxu0 0.0
      %1117 = vmatmul.mubr.f32.gmra.mxu0 %v879
      %v1118 = vpop.f32.mrf.mxu0
      %v1119 = vadd.f32 0.0, %v1118
      %v1120 = vpop.f32.mrf.mxu0
      %1121 = vdwg.mxu0
      %s1122 = scalar_lea.vmem %s225, 32
      %1123 = vst [vmem:[%s1122] sm:$0xff] %v964
      %1124 = vst [vmem:[%s1122 + $0x8] sm:$0xff] %v969
      %1125 = vst [vmem:[%s1122 + $0x40] sm:$0xff] %v974
      %1126 = vst [vmem:[%s1122 + $0x48] sm:$0xff] %v979
      %1127 = vst [vmem:[%s1122 + $0x80] sm:$0xff] %v984
      %1128 = vst [vmem:[%s1122 + $0x88] sm:$0xff] %v989
      %1129 = vst [vmem:[%s1122 + $0xc0] sm:$0xff] %v994
      %1130 = vst [vmem:[%s1122 + $0xc8] sm:$0xff] %v999
      %1131 = vst [vmem:[%s1122 + $0x100] sm:$0xff] %v1004
      %1132 = vst [vmem:[%s1122 + $0x108] sm:$0xff] %v1009
      %1133 = vst [vmem:[%s1122 + $0x140] sm:$0xff] %v1014
      %1134 = vst [vmem:[%s1122 + $0x148] sm:$0xff] %v1019
      %1135 = vst [vmem:[%s1122 + $0x180] sm:$0xff] %v1024
      %1136 = vst [vmem:[%s1122 + $0x188] sm:$0xff] %v1029
      %1137 = vst [vmem:[%s1122 + $0x1c0] sm:$0xff] %v1034
      %1138 = vst [vmem:[%s1122 + $0x1c8] sm:$0xff] %v1039
      %1139 = vst [vmem:[%s1122 + $0x200] sm:$0xff] %v1044
      %1140 = vst [vmem:[%s1122 + $0x208] sm:$0xff] %v1049
      %1141 = vst [vmem:[%s1122 + $0x240] sm:$0xff] %v1054
      %1142 = vst [vmem:[%s1122 + $0x248] sm:$0xff] %v1059
      %1143 = vst [vmem:[%s1122 + $0x280] sm:$0xff] %v1064
      %1144 = vst [vmem:[%s1122 + $0x288] sm:$0xff] %v1069
      %1145 = vst [vmem:[%s1122 + $0x2c0] sm:$0xff] %v1074
      %1146 = vst [vmem:[%s1122 + $0x2c8] sm:$0xff] %v1079
      %1147 = vst [vmem:[%s1122 + $0x300] sm:$0xff] %v1084
      %1148 = vst [vmem:[%s1122 + $0x308] sm:$0xff] %v1089
      %1149 = vst [vmem:[%s1122 + $0x340] sm:$0xff] %v1094
      %1150 = vst [vmem:[%s1122 + $0x348] sm:$0xff] %v1099
      %1151 = vst [vmem:[%s1122 + $0x380] sm:$0xff] %v1104
      %1152 = vst [vmem:[%s1122 + $0x388] sm:$0xff] %v1109
      %1153 = vst [vmem:[%s1122 + $0x3c0] sm:$0xff] %v1114
      %1154 = vst [vmem:[%s1122 + $0x3c8] sm:$0xff] %v1119
      %s1155 = scalar_lea.vmem %s214, 48
      %v1156 = vld [vmem:[%s1155] sm:$0xff]
      %v1157 = vld [vmem:[%s1155 + $0x8] sm:$0xff]
      %v1158 = vld [vmem:[%s1155 + $0x40] sm:$0xff]
      %v1159 = vld [vmem:[%s1155 + $0x48] sm:$0xff]
      %v1160 = vld [vmem:[%s1155 + $0x80] sm:$0xff]
      %v1161 = vld [vmem:[%s1155 + $0x88] sm:$0xff]
      %v1162 = vld [vmem:[%s1155 + $0xc0] sm:$0xff]
      %v1163 = vld [vmem:[%s1155 + $0xc8] sm:$0xff]
      %v1164 = vld [vmem:[%s1155 + $0x100] sm:$0xff]
      %v1165 = vld [vmem:[%s1155 + $0x108] sm:$0xff]
      %v1166 = vld [vmem:[%s1155 + $0x140] sm:$0xff]
      %v1167 = vld [vmem:[%s1155 + $0x148] sm:$0xff]
      %v1168 = vld [vmem:[%s1155 + $0x180] sm:$0xff]
      %v1169 = vld [vmem:[%s1155 + $0x188] sm:$0xff]
      %v1170 = vld [vmem:[%s1155 + $0x1c0] sm:$0xff]
      %v1171 = vld [vmem:[%s1155 + $0x1c8] sm:$0xff]
      %v1172 = vld [vmem:[%s1155 + $0x200] sm:$0xff]
      %v1173 = vld [vmem:[%s1155 + $0x208] sm:$0xff]
      %v1174 = vld [vmem:[%s1155 + $0x240] sm:$0xff]
      %v1175 = vld [vmem:[%s1155 + $0x248] sm:$0xff]
      %v1176 = vld [vmem:[%s1155 + $0x280] sm:$0xff]
      %v1177 = vld [vmem:[%s1155 + $0x288] sm:$0xff]
      %v1178 = vld [vmem:[%s1155 + $0x2c0] sm:$0xff]
      %v1179 = vld [vmem:[%s1155 + $0x2c8] sm:$0xff]
      %v1180 = vld [vmem:[%s1155 + $0x300] sm:$0xff]
      %v1181 = vld [vmem:[%s1155 + $0x308] sm:$0xff]
      %v1182 = vld [vmem:[%s1155 + $0x340] sm:$0xff]
      %v1183 = vld [vmem:[%s1155 + $0x348] sm:$0xff]
      %v1184 = vld [vmem:[%s1155 + $0x380] sm:$0xff]
      %v1185 = vld [vmem:[%s1155 + $0x388] sm:$0xff]
      %v1186 = vld [vmem:[%s1155 + $0x3c0] sm:$0xff]
      %v1187 = vld [vmem:[%s1155 + $0x3c8] sm:$0xff]
      %s1188 = scalar_lea.vmem %s1, 384
      %v1189 = vld [vmem:[%s1188] sm:$0xff]
      %v1190 = vld [vmem:[%s1188 + $0x8] sm:$0xff]
      %v1191 = vld [vmem:[%s1188 + $0x10] sm:$0xff]
      %v1192 = vld [vmem:[%s1188 + $0x18] sm:$0xff]
      %v1193 = vld [vmem:[%s1188 + $0x20] sm:$0xff]
      %v1194 = vld [vmem:[%s1188 + $0x28] sm:$0xff]
      %v1195 = vld [vmem:[%s1188 + $0x30] sm:$0xff]
      %v1196 = vld [vmem:[%s1188 + $0x38] sm:$0xff]
      %v1197 = vld [vmem:[%s1188 + $0x40] sm:$0xff]
      %v1198 = vld [vmem:[%s1188 + $0x48] sm:$0xff]
      %v1199 = vld [vmem:[%s1188 + $0x50] sm:$0xff]
      %v1200 = vld [vmem:[%s1188 + $0x58] sm:$0xff]
      %v1201 = vld [vmem:[%s1188 + $0x60] sm:$0xff]
      %v1202 = vld [vmem:[%s1188 + $0x68] sm:$0xff]
      %v1203 = vld [vmem:[%s1188 + $0x70] sm:$0xff]
      %v1204 = vld [vmem:[%s1188 + $0x78] sm:$0xff]
      %1205 = vmatprep.subr.mxu0 0.0
      %1206 = vmatpush1.msra.mxu0 %v1204
      %1207 = vmatprep.subr.mxu0 0.0
      %1208 = vmatpush1.msra.mxu0 %v1203
      %1209 = vmatprep.subr.mxu0 0.0
      %1210 = vmatpush1.msra.mxu0 %v1202
      %1211 = vmatprep.subr.mxu0 0.0
      %1212 = vmatpush1.msra.mxu0 %v1201
      %1213 = vmatprep.subr.mxu0 0.0
      %1214 = vmatpush1.msra.mxu0 %v1200
      %1215 = vmatprep.subr.mxu0 0.0
      %1216 = vmatpush1.msra.mxu0 %v1199
      %1217 = vmatprep.subr.mxu0 0.0
      %1218 = vmatpush1.msra.mxu0 %v1198
      %1219 = vmatprep.subr.mxu0 0.0
      %1220 = vmatpush1.msra.mxu0 %v1197
      %1221 = vmatprep.subr.mxu0 0.0
      %1222 = vmatpush1.msra.mxu0 %v1196
      %1223 = vmatprep.subr.mxu0 0.0
      %1224 = vmatpush1.msra.mxu0 %v1195
      %1225 = vmatprep.subr.mxu0 0.0
      %1226 = vmatpush1.msra.mxu0 %v1194
      %1227 = vmatprep.subr.mxu0 0.0
      %1228 = vmatpush1.msra.mxu0 %v1193
      %1229 = vmatprep.subr.mxu0 0.0
      %1230 = vmatpush1.msra.mxu0 %v1192
      %1231 = vmatprep.subr.mxu0 0.0
      %1232 = vmatpush1.msra.mxu0 %v1191
      %1233 = vmatprep.subr.mxu0 0.0
      %1234 = vmatpush1.msra.mxu0 %v1190
      %1235 = vmatprep.subr.mxu0 0.0
      %1236 = vmatpush1.msra.mxu0 %v1189
      %1237 = vmatprep.subr.mxu0 0.0
      %1238 = vmatpush2.msra.mxu0 0.0
      %1239 = vmatprep.subr.mxu0 0.0
      %1240 = vmatpush2.msra.mxu0 0.0
      %1241 = vmatprep.subr.mxu0 0.0
      %1242 = vmatpush2.msra.mxu0 0.0
      %1243 = vmatprep.subr.mxu0 0.0
      %1244 = vmatpush2.msra.mxu0 0.0
      %1245 = vmatprep.subr.mxu0 0.0
      %1246 = vmatpush2.msra.mxu0 0.0
      %1247 = vmatprep.subr.mxu0 0.0
      %1248 = vmatpush2.msra.mxu0 0.0
      %1249 = vmatprep.subr.mxu0 0.0
      %1250 = vmatpush2.msra.mxu0 0.0
      %1251 = vmatprep.subr.mxu0 0.0
      %1252 = vmatpush2.msra.mxu0 0.0
      %1253 = vmatprep.subr.mxu0 0.0
      %1254 = vmatpush2.msra.mxu0 0.0
      %1255 = vmatprep.subr.mxu0 0.0
      %1256 = vmatpush2.msra.mxu0 0.0
      %1257 = vmatprep.subr.mxu0 0.0
      %1258 = vmatpush2.msra.mxu0 0.0
      %1259 = vmatprep.subr.mxu0 0.0
      %1260 = vmatpush2.msra.mxu0 0.0
      %1261 = vmatprep.subr.mxu0 0.0
      %1262 = vmatpush2.msra.mxu0 0.0
      %1263 = vmatprep.subr.mxu0 0.0
      %1264 = vmatpush2.msra.mxu0 0.0
      %1265 = vmatprep.subr.mxu0 0.0
      %1266 = vmatpush2.msra.mxu0 0.0
      %1267 = vmatprep.subr.mxu0 0.0
      %1268 = vmatpush2.msra.mxu0 0.0
      %1269 = vmatprep.mubr.f32.mxu0 0.0
      %1270 = vmatmul.mubr.f32.gmra.mxu0 %v1156
      %v1271 = vpop.f32.mrf.mxu0
      %v1272 = vadd.f32 0.0, %v1271
      %v1273 = vpop.f32.mrf.mxu0
      %1274 = vmatprep.mubr.f32.mxu0 0.0
      %1275 = vmatmul.mubr.f32.gmra.mxu0 %v1157
      %v1276 = vpop.f32.mrf.mxu0
      %v1277 = vadd.f32 0.0, %v1276
      %v1278 = vpop.f32.mrf.mxu0
      %1279 = vmatprep.mubr.f32.mxu0 0.0
      %1280 = vmatmul.mubr.f32.gmra.mxu0 %v1158
      %v1281 = vpop.f32.mrf.mxu0
      %v1282 = vadd.f32 0.0, %v1281
      %v1283 = vpop.f32.mrf.mxu0
      %1284 = vmatprep.mubr.f32.mxu0 0.0
      %1285 = vmatmul.mubr.f32.gmra.mxu0 %v1159
      %v1286 = vpop.f32.mrf.mxu0
      %v1287 = vadd.f32 0.0, %v1286
      %v1288 = vpop.f32.mrf.mxu0
      %1289 = vmatprep.mubr.f32.mxu0 0.0
      %1290 = vmatmul.mubr.f32.gmra.mxu0 %v1160
      %v1291 = vpop.f32.mrf.mxu0
      %v1292 = vadd.f32 0.0, %v1291
      %v1293 = vpop.f32.mrf.mxu0
      %1294 = vmatprep.mubr.f32.mxu0 0.0
      %1295 = vmatmul.mubr.f32.gmra.mxu0 %v1161
      %v1296 = vpop.f32.mrf.mxu0
      %v1297 = vadd.f32 0.0, %v1296
      %v1298 = vpop.f32.mrf.mxu0
      %1299 = vmatprep.mubr.f32.mxu0 0.0
      %1300 = vmatmul.mubr.f32.gmra.mxu0 %v1162
      %v1301 = vpop.f32.mrf.mxu0
      %v1302 = vadd.f32 0.0, %v1301
      %v1303 = vpop.f32.mrf.mxu0
      %1304 = vmatprep.mubr.f32.mxu0 0.0
      %1305 = vmatmul.mubr.f32.gmra.mxu0 %v1163
      %v1306 = vpop.f32.mrf.mxu0
      %v1307 = vadd.f32 0.0, %v1306
      %v1308 = vpop.f32.mrf.mxu0
      %1309 = vmatprep.mubr.f32.mxu0 0.0
      %1310 = vmatmul.mubr.f32.gmra.mxu0 %v1164
      %v1311 = vpop.f32.mrf.mxu0
      %v1312 = vadd.f32 0.0, %v1311
      %v1313 = vpop.f32.mrf.mxu0
      %1314 = vmatprep.mubr.f32.mxu0 0.0
      %1315 = vmatmul.mubr.f32.gmra.mxu0 %v1165
      %v1316 = vpop.f32.mrf.mxu0
      %v1317 = vadd.f32 0.0, %v1316
      %v1318 = vpop.f32.mrf.mxu0
      %1319 = vmatprep.mubr.f32.mxu0 0.0
      %1320 = vmatmul.mubr.f32.gmra.mxu0 %v1166
      %v1321 = vpop.f32.mrf.mxu0
      %v1322 = vadd.f32 0.0, %v1321
      %v1323 = vpop.f32.mrf.mxu0
      %1324 = vmatprep.mubr.f32.mxu0 0.0
      %1325 = vmatmul.mubr.f32.gmra.mxu0 %v1167
      %v1326 = vpop.f32.mrf.mxu0
      %v1327 = vadd.f32 0.0, %v1326
      %v1328 = vpop.f32.mrf.mxu0
      %1329 = vmatprep.mubr.f32.mxu0 0.0
      %1330 = vmatmul.mubr.f32.gmra.mxu0 %v1168
      %v1331 = vpop.f32.mrf.mxu0
      %v1332 = vadd.f32 0.0, %v1331
      %v1333 = vpop.f32.mrf.mxu0
      %1334 = vmatprep.mubr.f32.mxu0 0.0
      %1335 = vmatmul.mubr.f32.gmra.mxu0 %v1169
      %v1336 = vpop.f32.mrf.mxu0
      %v1337 = vadd.f32 0.0, %v1336
      %v1338 = vpop.f32.mrf.mxu0
      %1339 = vmatprep.mubr.f32.mxu0 0.0
      %1340 = vmatmul.mubr.f32.gmra.mxu0 %v1170
      %v1341 = vpop.f32.mrf.mxu0
      %v1342 = vadd.f32 0.0, %v1341
      %v1343 = vpop.f32.mrf.mxu0
      %1344 = vmatprep.mubr.f32.mxu0 0.0
      %1345 = vmatmul.mubr.f32.gmra.mxu0 %v1171
      %v1346 = vpop.f32.mrf.mxu0
      %v1347 = vadd.f32 0.0, %v1346
      %v1348 = vpop.f32.mrf.mxu0
      %1349 = vmatprep.mubr.f32.mxu0 0.0
      %1350 = vmatmul.mubr.f32.gmra.mxu0 %v1172
      %v1351 = vpop.f32.mrf.mxu0
      %v1352 = vadd.f32 0.0, %v1351
      %v1353 = vpop.f32.mrf.mxu0
      %1354 = vmatprep.mubr.f32.mxu0 0.0
      %1355 = vmatmul.mubr.f32.gmra.mxu0 %v1173
      %v1356 = vpop.f32.mrf.mxu0
      %v1357 = vadd.f32 0.0, %v1356
      %v1358 = vpop.f32.mrf.mxu0
      %1359 = vmatprep.mubr.f32.mxu0 0.0
      %1360 = vmatmul.mubr.f32.gmra.mxu0 %v1174
      %v1361 = vpop.f32.mrf.mxu0
      %v1362 = vadd.f32 0.0, %v1361
      %v1363 = vpop.f32.mrf.mxu0
      %1364 = vmatprep.mubr.f32.mxu0 0.0
      %1365 = vmatmul.mubr.f32.gmra.mxu0 %v1175
      %v1366 = vpop.f32.mrf.mxu0
      %v1367 = vadd.f32 0.0, %v1366
      %v1368 = vpop.f32.mrf.mxu0
      %1369 = vmatprep.mubr.f32.mxu0 0.0
      %1370 = vmatmul.mubr.f32.gmra.mxu0 %v1176
      %v1371 = vpop.f32.mrf.mxu0
      %v1372 = vadd.f32 0.0, %v1371
      %v1373 = vpop.f32.mrf.mxu0
      %1374 = vmatprep.mubr.f32.mxu0 0.0
      %1375 = vmatmul.mubr.f32.gmra.mxu0 %v1177
      %v1376 = vpop.f32.mrf.mxu0
      %v1377 = vadd.f32 0.0, %v1376
      %v1378 = vpop.f32.mrf.mxu0
      %1379 = vmatprep.mubr.f32.mxu0 0.0
      %1380 = vmatmul.mubr.f32.gmra.mxu0 %v1178
      %v1381 = vpop.f32.mrf.mxu0
      %v1382 = vadd.f32 0.0, %v1381
      %v1383 = vpop.f32.mrf.mxu0
      %1384 = vmatprep.mubr.f32.mxu0 0.0
      %1385 = vmatmul.mubr.f32.gmra.mxu0 %v1179
      %v1386 = vpop.f32.mrf.mxu0
      %v1387 = vadd.f32 0.0, %v1386
      %v1388 = vpop.f32.mrf.mxu0
      %1389 = vmatprep.mubr.f32.mxu0 0.0
      %1390 = vmatmul.mubr.f32.gmra.mxu0 %v1180
      %v1391 = vpop.f32.mrf.mxu0
      %v1392 = vadd.f32 0.0, %v1391
      %v1393 = vpop.f32.mrf.mxu0
      %1394 = vmatprep.mubr.f32.mxu0 0.0
      %1395 = vmatmul.mubr.f32.gmra.mxu0 %v1181
      %v1396 = vpop.f32.mrf.mxu0
      %v1397 = vadd.f32 0.0, %v1396
      %v1398 = vpop.f32.mrf.mxu0
      %1399 = vmatprep.mubr.f32.mxu0 0.0
      %1400 = vmatmul.mubr.f32.gmra.mxu0 %v1182
      %v1401 = vpop.f32.mrf.mxu0
      %v1402 = vadd.f32 0.0, %v1401
      %v1403 = vpop.f32.mrf.mxu0
      %1404 = vmatprep.mubr.f32.mxu0 0.0
      %1405 = vmatmul.mubr.f32.gmra.mxu0 %v1183
      %v1406 = vpop.f32.mrf.mxu0
      %v1407 = vadd.f32 0.0, %v1406
      %v1408 = vpop.f32.mrf.mxu0
      %1409 = vmatprep.mubr.f32.mxu0 0.0
      %1410 = vmatmul.mubr.f32.gmra.mxu0 %v1184
      %v1411 = vpop.f32.mrf.mxu0
      %v1412 = vadd.f32 0.0, %v1411
      %v1413 = vpop.f32.mrf.mxu0
      %1414 = vmatprep.mubr.f32.mxu0 0.0
      %1415 = vmatmul.mubr.f32.gmra.mxu0 %v1185
      %v1416 = vpop.f32.mrf.mxu0
      %v1417 = vadd.f32 0.0, %v1416
      %v1418 = vpop.f32.mrf.mxu0
      %1419 = vmatprep.mubr.f32.mxu0 0.0
      %1420 = vmatmul.mubr.f32.gmra.mxu0 %v1186
      %v1421 = vpop.f32.mrf.mxu0
      %v1422 = vadd.f32 0.0, %v1421
      %v1423 = vpop.f32.mrf.mxu0
      %1424 = vmatprep.mubr.f32.mxu0 0.0
      %1425 = vmatmul.mubr.f32.gmra.mxu0 %v1187
      %v1426 = vpop.f32.mrf.mxu0
      %v1427 = vadd.f32 0.0, %v1426
      %v1428 = vpop.f32.mrf.mxu0
      %1429 = vdwg.mxu0
      %s1430 = scalar_lea.vmem %s225, 48
      %1431 = vst [vmem:[%s1430] sm:$0xff] %v1272
      %1432 = vst [vmem:[%s1430 + $0x8] sm:$0xff] %v1277
      %1433 = vst [vmem:[%s1430 + $0x40] sm:$0xff] %v1282
      %1434 = vst [vmem:[%s1430 + $0x48] sm:$0xff] %v1287
      %1435 = vst [vmem:[%s1430 + $0x80] sm:$0xff] %v1292
      %1436 = vst [vmem:[%s1430 + $0x88] sm:$0xff] %v1297
      %1437 = vst [vmem:[%s1430 + $0xc0] sm:$0xff] %v1302
      %1438 = vst [vmem:[%s1430 + $0xc8] sm:$0xff] %v1307
      %1439 = vst [vmem:[%s1430 + $0x100] sm:$0xff] %v1312
      %1440 = vst [vmem:[%s1430 + $0x108] sm:$0xff] %v1317
      %1441 = vst [vmem:[%s1430 + $0x140] sm:$0xff] %v1322
      %1442 = vst [vmem:[%s1430 + $0x148] sm:$0xff] %v1327
      %1443 = vst [vmem:[%s1430 + $0x180] sm:$0xff] %v1332
      %1444 = vst [vmem:[%s1430 + $0x188] sm:$0xff] %v1337
      %1445 = vst [vmem:[%s1430 + $0x1c0] sm:$0xff] %v1342
      %1446 = vst [vmem:[%s1430 + $0x1c8] sm:$0xff] %v1347
      %1447 = vst [vmem:[%s1430 + $0x200] sm:$0xff] %v1352
      %1448 = vst [vmem:[%s1430 + $0x208] sm:$0xff] %v1357
      %1449 = vst [vmem:[%s1430 + $0x240] sm:$0xff] %v1362
      %1450 = vst [vmem:[%s1430 + $0x248] sm:$0xff] %v1367
      %1451 = vst [vmem:[%s1430 + $0x280] sm:$0xff] %v1372
      %1452 = vst [vmem:[%s1430 + $0x288] sm:$0xff] %v1377
      %1453 = vst [vmem:[%s1430 + $0x2c0] sm:$0xff] %v1382
      %1454 = vst [vmem:[%s1430 + $0x2c8] sm:$0xff] %v1387
      %1455 = vst [vmem:[%s1430 + $0x300] sm:$0xff] %v1392
      %1456 = vst [vmem:[%s1430 + $0x308] sm:$0xff] %v1397
      %1457 = vst [vmem:[%s1430 + $0x340] sm:$0xff] %v1402
      %1458 = vst [vmem:[%s1430 + $0x348] sm:$0xff] %v1407
      %1459 = vst [vmem:[%s1430 + $0x380] sm:$0xff] %v1412
      %1460 = vst [vmem:[%s1430 + $0x388] sm:$0xff] %v1417
      %1461 = vst [vmem:[%s1430 + $0x3c0] sm:$0xff] %v1422
      %1462 = vst [vmem:[%s1430 + $0x3c8] sm:$0xff] %v1427
      %v1463 = vld [vmem:[%s225] sm:$0xff]
      %v1464 = vld [vmem:[%s225 + $0x8] sm:$0xff]
      %v1465 = vld [vmem:[%s225 + $0x10] sm:$0xff]
      %v1466 = vld [vmem:[%s225 + $0x18] sm:$0xff]
      %v1467 = vld [vmem:[%s225 + $0x20] sm:$0xff]
      %v1468 = vld [vmem:[%s225 + $0x28] sm:$0xff]
      %v1469 = vld [vmem:[%s225 + $0x30] sm:$0xff]
      %v1470 = vld [vmem:[%s225 + $0x38] sm:$0xff]
      %v1471 = vld [vmem:[%s225 + $0x40] sm:$0xff]
      %v1472 = vld [vmem:[%s225 + $0x48] sm:$0xff]
      %v1473 = vld [vmem:[%s225 + $0x50] sm:$0xff]
      %v1474 = vld [vmem:[%s225 + $0x58] sm:$0xff]
      %v1475 = vld [vmem:[%s225 + $0x60] sm:$0xff]
      %v1476 = vld [vmem:[%s225 + $0x68] sm:$0xff]
      %v1477 = vld [vmem:[%s225 + $0x70] sm:$0xff]
      %v1478 = vld [vmem:[%s225 + $0x78] sm:$0xff]
      %v1479 = vld [vmem:[%s225 + $0x80] sm:$0xff]
      %v1480 = vld [vmem:[%s225 + $0x88] sm:$0xff]
      %v1481 = vld [vmem:[%s225 + $0x90] sm:$0xff]
      %v1482 = vld [vmem:[%s225 + $0x98] sm:$0xff]
      %v1483 = vld [vmem:[%s225 + $0xa0] sm:$0xff]
      %v1484 = vld [vmem:[%s225 + $0xa8] sm:$0xff]
      %v1485 = vld [vmem:[%s225 + $0xb0] sm:$0xff]
      %v1486 = vld [vmem:[%s225 + $0xb8] sm:$0xff]
      %v1487 = vld [vmem:[%s225 + $0xc0] sm:$0xff]
      %v1488 = vld [vmem:[%s225 + $0xc8] sm:$0xff]
      %v1489 = vld [vmem:[%s225 + $0xd0] sm:$0xff]
      %v1490 = vld [vmem:[%s225 + $0xd8] sm:$0xff]
      %v1491 = vld [vmem:[%s225 + $0xe0] sm:$0xff]
      %v1492 = vld [vmem:[%s225 + $0xe8] sm:$0xff]
      %v1493 = vld [vmem:[%s225 + $0xf0] sm:$0xff]
      %v1494 = vld [vmem:[%s225 + $0xf8] sm:$0xff]
      %v1495 = vld [vmem:[%s225 + $0x100] sm:$0xff]
      %v1496 = vld [vmem:[%s225 + $0x108] sm:$0xff]
      %v1497 = vld [vmem:[%s225 + $0x110] sm:$0xff]
      %v1498 = vld [vmem:[%s225 + $0x118] sm:$0xff]
      %v1499 = vld [vmem:[%s225 + $0x120] sm:$0xff]
      %v1500 = vld [vmem:[%s225 + $0x128] sm:$0xff]
      %v1501 = vld [vmem:[%s225 + $0x130] sm:$0xff]
      %v1502 = vld [vmem:[%s225 + $0x138] sm:$0xff]
      %v1503 = vld [vmem:[%s225 + $0x140] sm:$0xff]
      %v1504 = vld [vmem:[%s225 + $0x148] sm:$0xff]
      %v1505 = vld [vmem:[%s225 + $0x150] sm:$0xff]
      %v1506 = vld [vmem:[%s225 + $0x158] sm:$0xff]
      %v1507 = vld [vmem:[%s225 + $0x160] sm:$0xff]
      %v1508 = vld [vmem:[%s225 + $0x168] sm:$0xff]
      %v1509 = vld [vmem:[%s225 + $0x170] sm:$0xff]
      %v1510 = vld [vmem:[%s225 + $0x178] sm:$0xff]
      %v1511 = vld [vmem:[%s225 + $0x180] sm:$0xff]
      %v1512 = vld [vmem:[%s225 + $0x188] sm:$0xff]
      %v1513 = vld [vmem:[%s225 + $0x190] sm:$0xff]
      %v1514 = vld [vmem:[%s225 + $0x198] sm:$0xff]
      %v1515 = vld [vmem:[%s225 + $0x1a0] sm:$0xff]
      %v1516 = vld [vmem:[%s225 + $0x1a8] sm:$0xff]
      %v1517 = vld [vmem:[%s225 + $0x1b0] sm:$0xff]
      %v1518 = vld [vmem:[%s225 + $0x1b8] sm:$0xff]
      %v1519 = vld [vmem:[%s225 + $0x1c0] sm:$0xff]
      %v1520 = vld [vmem:[%s225 + $0x1c8] sm:$0xff]
      %v1521 = vld [vmem:[%s225 + $0x1d0] sm:$0xff]
      %v1522 = vld [vmem:[%s225 + $0x1d8] sm:$0xff]
      %v1523 = vld [vmem:[%s225 + $0x1e0] sm:$0xff]
      %v1524 = vld [vmem:[%s225 + $0x1e8] sm:$0xff]
      %v1525 = vld [vmem:[%s225 + $0x1f0] sm:$0xff]
      %v1526 = vld [vmem:[%s225 + $0x1f8] sm:$0xff]
      %v1527 = vld [vmem:[%s225 + $0x200] sm:$0xff]
      %v1528 = vld [vmem:[%s225 + $0x208] sm:$0xff]
      %v1529 = vld [vmem:[%s225 + $0x210] sm:$0xff]
      %v1530 = vld [vmem:[%s225 + $0x218] sm:$0xff]
      %v1531 = vld [vmem:[%s225 + $0x220] sm:$0xff]
      %v1532 = vld [vmem:[%s225 + $0x228] sm:$0xff]
      %v1533 = vld [vmem:[%s225 + $0x230] sm:$0xff]
      %v1534 = vld [vmem:[%s225 + $0x238] sm:$0xff]
      %v1535 = vld [vmem:[%s225 + $0x240] sm:$0xff]
      %v1536 = vld [vmem:[%s225 + $0x248] sm:$0xff]
      %v1537 = vld [vmem:[%s225 + $0x250] sm:$0xff]
      %v1538 = vld [vmem:[%s225 + $0x258] sm:$0xff]
      %v1539 = vld [vmem:[%s225 + $0x260] sm:$0xff]
      %v1540 = vld [vmem:[%s225 + $0x268] sm:$0xff]
      %v1541 = vld [vmem:[%s225 + $0x270] sm:$0xff]
      %v1542 = vld [vmem:[%s225 + $0x278] sm:$0xff]
      %v1543 = vld [vmem:[%s225 + $0x280] sm:$0xff]
      %v1544 = vld [vmem:[%s225 + $0x288] sm:$0xff]
      %v1545 = vld [vmem:[%s225 + $0x290] sm:$0xff]
      %v1546 = vld [vmem:[%s225 + $0x298] sm:$0xff]
      %v1547 = vld [vmem:[%s225 + $0x2a0] sm:$0xff]
      %v1548 = vld [vmem:[%s225 + $0x2a8] sm:$0xff]
      %v1549 = vld [vmem:[%s225 + $0x2b0] sm:$0xff]
      %v1550 = vld [vmem:[%s225 + $0x2b8] sm:$0xff]
      %v1551 = vld [vmem:[%s225 + $0x2c0] sm:$0xff]
      %v1552 = vld [vmem:[%s225 + $0x2c8] sm:$0xff]
      %v1553 = vld [vmem:[%s225 + $0x2d0] sm:$0xff]
      %v1554 = vld [vmem:[%s225 + $0x2d8] sm:$0xff]
      %v1555 = vld [vmem:[%s225 + $0x2e0] sm:$0xff]
      %v1556 = vld [vmem:[%s225 + $0x2e8] sm:$0xff]
      %v1557 = vld [vmem:[%s225 + $0x2f0] sm:$0xff]
      %v1558 = vld [vmem:[%s225 + $0x2f8] sm:$0xff]
      %v1559 = vld [vmem:[%s225 + $0x300] sm:$0xff]
      %v1560 = vld [vmem:[%s225 + $0x308] sm:$0xff]
      %v1561 = vld [vmem:[%s225 + $0x310] sm:$0xff]
      %v1562 = vld [vmem:[%s225 + $0x318] sm:$0xff]
      %v1563 = vld [vmem:[%s225 + $0x320] sm:$0xff]
      %v1564 = vld [vmem:[%s225 + $0x328] sm:$0xff]
      %v1565 = vld [vmem:[%s225 + $0x330] sm:$0xff]
      %v1566 = vld [vmem:[%s225 + $0x338] sm:$0xff]
      %v1567 = vld [vmem:[%s225 + $0x340] sm:$0xff]
      %v1568 = vld [vmem:[%s225 + $0x348] sm:$0xff]
      %v1569 = vld [vmem:[%s225 + $0x350] sm:$0xff]
      %v1570 = vld [vmem:[%s225 + $0x358] sm:$0xff]
      %v1571 = vld [vmem:[%s225 + $0x360] sm:$0xff]
      %v1572 = vld [vmem:[%s225 + $0x368] sm:$0xff]
      %v1573 = vld [vmem:[%s225 + $0x370] sm:$0xff]
      %v1574 = vld [vmem:[%s225 + $0x378] sm:$0xff]
      %v1575 = vld [vmem:[%s225 + $0x380] sm:$0xff]
      %v1576 = vld [vmem:[%s225 + $0x388] sm:$0xff]
      %v1577 = vld [vmem:[%s225 + $0x390] sm:$0xff]
      %v1578 = vld [vmem:[%s225 + $0x398] sm:$0xff]
      %v1579 = vld [vmem:[%s225 + $0x3a0] sm:$0xff]
      %v1580 = vld [vmem:[%s225 + $0x3a8] sm:$0xff]
      %v1581 = vld [vmem:[%s225 + $0x3b0] sm:$0xff]
      %v1582 = vld [vmem:[%s225 + $0x3b8] sm:$0xff]
      %v1583 = vld [vmem:[%s225 + $0x3c0] sm:$0xff]
      %v1584 = vld [vmem:[%s225 + $0x3c8] sm:$0xff]
      %v1585 = vld [vmem:[%s225 + $0x3d0] sm:$0xff]
      %v1586 = vld [vmem:[%s225 + $0x3d8] sm:$0xff]
      %v1587 = vld [vmem:[%s225 + $0x3e0] sm:$0xff]
      %v1588 = vld [vmem:[%s225 + $0x3e8] sm:$0xff]
      %v1589 = vld [vmem:[%s225 + $0x3f0] sm:$0xff]
      %v1590 = vld [vmem:[%s225 + $0x3f8] sm:$0xff]
      %v1591 = vadd.f32 %v1463, %v1464
      %v1592 = vadd.f32 %v1591, %v1465
      %v1593 = vadd.f32 %v1592, %v1466
      %v1594 = vadd.f32 %v1593, %v1467
      %v1595 = vadd.f32 %v1594, %v1468
      %v1596 = vadd.f32 %v1595, %v1469
      %v1597 = vadd.f32 %v1596, %v1470
      %v1598 = vadd.f32 %v1597, %v1471
      %v1599 = vadd.f32 %v1598, %v1472
      %v1600 = vadd.f32 %v1599, %v1473
      %v1601 = vadd.f32 %v1600, %v1474
      %v1602 = vadd.f32 %v1601, %v1475
      %v1603 = vadd.f32 %v1602, %v1476
      %v1604 = vadd.f32 %v1603, %v1477
      %v1605 = vadd.f32 %v1604, %v1478
      %v1606 = vadd.f32 %v1605, %v1479
      %v1607 = vadd.f32 %v1606, %v1480
      %v1608 = vadd.f32 %v1607, %v1481
      %v1609 = vadd.f32 %v1608, %v1482
      %v1610 = vadd.f32 %v1609, %v1483
      %v1611 = vadd.f32 %v1610, %v1484
      %v1612 = vadd.f32 %v1611, %v1485
      %v1613 = vadd.f32 %v1612, %v1486
      %v1614 = vadd.f32 %v1613, %v1487
      %v1615 = vadd.f32 %v1614, %v1488
      %v1616 = vadd.f32 %v1615, %v1489
      %v1617 = vadd.f32 %v1616, %v1490
      %v1618 = vadd.f32 %v1617, %v1491
      %v1619 = vadd.f32 %v1618, %v1492
      %v1620 = vadd.f32 %v1619, %v1493
      %v1621 = vadd.f32 %v1620, %v1494
      %v1622 = vadd.f32 %v1621, %v1495
      %v1623 = vadd.f32 %v1622, %v1496
      %v1624 = vadd.f32 %v1623, %v1497
      %v1625 = vadd.f32 %v1624, %v1498
      %v1626 = vadd.f32 %v1625, %v1499
      %v1627 = vadd.f32 %v1626, %v1500
      %v1628 = vadd.f32 %v1627, %v1501
      %v1629 = vadd.f32 %v1628, %v1502
      %v1630 = vadd.f32 %v1629, %v1503
      %v1631 = vadd.f32 %v1630, %v1504
      %v1632 = vadd.f32 %v1631, %v1505
      %v1633 = vadd.f32 %v1632, %v1506
      %v1634 = vadd.f32 %v1633, %v1507
      %v1635 = vadd.f32 %v1634, %v1508
      %v1636 = vadd.f32 %v1635, %v1509
      %v1637 = vadd.f32 %v1636, %v1510
      %v1638 = vadd.f32 %v1637, %v1511
      %v1639 = vadd.f32 %v1638, %v1512
      %v1640 = vadd.f32 %v1639, %v1513
      %v1641 = vadd.f32 %v1640, %v1514
      %v1642 = vadd.f32 %v1641, %v1515
      %v1643 = vadd.f32 %v1642, %v1516
      %v1644 = vadd.f32 %v1643, %v1517
      %v1645 = vadd.f32 %v1644, %v1518
      %v1646 = vadd.f32 %v1645, %v1519
      %v1647 = vadd.f32 %v1646, %v1520
      %v1648 = vadd.f32 %v1647, %v1521
      %v1649 = vadd.f32 %v1648, %v1522
      %v1650 = vadd.f32 %v1649, %v1523
      %v1651 = vadd.f32 %v1650, %v1524
      %v1652 = vadd.f32 %v1651, %v1525
      %v1653 = vadd.f32 %v1652, %v1526
      %v1654 = vadd.f32 %v1653, %v1527
      %v1655 = vadd.f32 %v1654, %v1528
      %v1656 = vadd.f32 %v1655, %v1529
      %v1657 = vadd.f32 %v1656, %v1530
      %v1658 = vadd.f32 %v1657, %v1531
      %v1659 = vadd.f32 %v1658, %v1532
      %v1660 = vadd.f32 %v1659, %v1533
      %v1661 = vadd.f32 %v1660, %v1534
      %v1662 = vadd.f32 %v1661, %v1535
      %v1663 = vadd.f32 %v1662, %v1536
      %v1664 = vadd.f32 %v1663, %v1537
      %v1665 = vadd.f32 %v1664, %v1538
      %v1666 = vadd.f32 %v1665, %v1539
      %v1667 = vadd.f32 %v1666, %v1540
      %v1668 = vadd.f32 %v1667, %v1541
      %v1669 = vadd.f32 %v1668, %v1542
      %v1670 = vadd.f32 %v1669, %v1543
      %v1671 = vadd.f32 %v1670, %v1544
      %v1672 = vadd.f32 %v1671, %v1545
      %v1673 = vadd.f32 %v1672, %v1546
      %v1674 = vadd.f32 %v1673, %v1547
      %v1675 = vadd.f32 %v1674, %v1548
      %v1676 = vadd.f32 %v1675, %v1549
      %v1677 = vadd.f32 %v1676, %v1550
      %v1678 = vadd.f32 %v1677, %v1551
      %v1679 = vadd.f32 %v1678, %v1552
      %v1680 = vadd.f32 %v1679, %v1553
      %v1681 = vadd.f32 %v1680, %v1554
      %v1682 = vadd.f32 %v1681, %v1555
      %v1683 = vadd.f32 %v1682, %v1556
      %v1684 = vadd.f32 %v1683, %v1557
      %v1685 = vadd.f32 %v1684, %v1558
      %v1686 = vadd.f32 %v1685, %v1559
      %v1687 = vadd.f32 %v1686, %v1560
      %v1688 = vadd.f32 %v1687, %v1561
      %v1689 = vadd.f32 %v1688, %v1562
      %v1690 = vadd.f32 %v1689, %v1563
      %v1691 = vadd.f32 %v1690, %v1564
      %v1692 = vadd.f32 %v1691, %v1565
      %v1693 = vadd.f32 %v1692, %v1566
      %v1694 = vadd.f32 %v1693, %v1567
      %v1695 = vadd.f32 %v1694, %v1568
      %v1696 = vadd.f32 %v1695, %v1569
      %v1697 = vadd.f32 %v1696, %v1570
      %v1698 = vadd.f32 %v1697, %v1571
      %v1699 = vadd.f32 %v1698, %v1572
      %v1700 = vadd.f32 %v1699, %v1573
      %v1701 = vadd.f32 %v1700, %v1574
      %v1702 = vadd.f32 %v1701, %v1575
      %v1703 = vadd.f32 %v1702, %v1576
      %v1704 = vadd.f32 %v1703, %v1577
      %v1705 = vadd.f32 %v1704, %v1578
      %v1706 = vadd.f32 %v1705, %v1579
      %v1707 = vadd.f32 %v1706, %v1580
      %v1708 = vadd.f32 %v1707, %v1581
      %v1709 = vadd.f32 %v1708, %v1582
      %v1710 = vadd.f32 %v1709, %v1583
      %v1711 = vadd.f32 %v1710, %v1584
      %v1712 = vadd.f32 %v1711, %v1585
      %v1713 = vadd.f32 %v1712, %v1586
      %v1714 = vadd.f32 %v1713, %v1587
      %v1715 = vadd.f32 %v1714, %v1588
      %v1716 = vadd.f32 %v1715, %v1589
      %v1717 = vadd.f32 %v1716, %v1590
      %v1718 = vrot.slane %v1717, 4
      %v1719 = vadd.f32 %v1717, %v1718
      %v1720 = vrot.slane %v1719, 2
      %v1721 = vadd.f32 %v1719, %v1720
      %v1722 = vrot.slane %v1721, 1
      %v1723 = vadd.f32 %v1721, %v1722
      %v1724 = vmul.f32 %v1463, %v1463
      %v1725 = vmul.f32 %v1464, %v1464
      %v1726 = vmul.f32 %v1465, %v1465
      %v1727 = vmul.f32 %v1466, %v1466
      %v1728 = vmul.f32 %v1467, %v1467
      %v1729 = vmul.f32 %v1468, %v1468
      %v1730 = vmul.f32 %v1469, %v1469
      %v1731 = vmul.f32 %v1470, %v1470
      %v1732 = vmul.f32 %v1471, %v1471
      %v1733 = vmul.f32 %v1472, %v1472
      %v1734 = vmul.f32 %v1473, %v1473
      %v1735 = vmul.f32 %v1474, %v1474
      %v1736 = vmul.f32 %v1475, %v1475
      %v1737 = vmul.f32 %v1476, %v1476
      %v1738 = vmul.f32 %v1477, %v1477
      %v1739 = vmul.f32 %v1478, %v1478
      %v1740 = vmul.f32 %v1479, %v1479
      %v1741 = vmul.f32 %v1480, %v1480
      %v1742 = vmul.f32 %v1481, %v1481
      %v1743 = vmul.f32 %v1482, %v1482
      %v1744 = vmul.f32 %v1483, %v1483
      %v1745 = vmul.f32 %v1484, %v1484
      %v1746 = vmul.f32 %v1485, %v1485
      %v1747 = vmul.f32 %v1486, %v1486
      %v1748 = vmul.f32 %v1487, %v1487
      %v1749 = vmul.f32 %v1488, %v1488
      %v1750 = vmul.f32 %v1489, %v1489
      %v1751 = vmul.f32 %v1490, %v1490
      %v1752 = vmul.f32 %v1491, %v1491
      %v1753 = vmul.f32 %v1492, %v1492
      %v1754 = vmul.f32 %v1493, %v1493
      %v1755 = vmul.f32 %v1494, %v1494
      %v1756 = vmul.f32 %v1495, %v1495
      %v1757 = vmul.f32 %v1496, %v1496
      %v1758 = vmul.f32 %v1497, %v1497
      %v1759 = vmul.f32 %v1498, %v1498
      %v1760 = vmul.f32 %v1499, %v1499
      %v1761 = vmul.f32 %v1500, %v1500
      %v1762 = vmul.f32 %v1501, %v1501
      %v1763 = vmul.f32 %v1502, %v1502
      %v1764 = vmul.f32 %v1503, %v1503
      %v1765 = vmul.f32 %v1504, %v1504
      %v1766 = vmul.f32 %v1505, %v1505
      %v1767 = vmul.f32 %v1506, %v1506
      %v1768 = vmul.f32 %v1507, %v1507
      %v1769 = vmul.f32 %v1508, %v1508
      %v1770 = vmul.f32 %v1509, %v1509
      %v1771 = vmul.f32 %v1510, %v1510
      %v1772 = vmul.f32 %v1511, %v1511
      %v1773 = vmul.f32 %v1512, %v1512
      %v1774 = vmul.f32 %v1513, %v1513
      %v1775 = vmul.f32 %v1514, %v1514
      %v1776 = vmul.f32 %v1515, %v1515
      %v1777 = vmul.f32 %v1516, %v1516
      %v1778 = vmul.f32 %v1517, %v1517
      %v1779 = vmul.f32 %v1518, %v1518
      %v1780 = vmul.f32 %v1519, %v1519
      %v1781 = vmul.f32 %v1520, %v1520
      %v1782 = vmul.f32 %v1521, %v1521
      %v1783 = vmul.f32 %v1522, %v1522
      %v1784 = vmul.f32 %v1523, %v1523
      %v1785 = vmul.f32 %v1524, %v1524
      %v1786 = vmul.f32 %v1525, %v1525
      %v1787 = vmul.f32 %v1526, %v1526
      %v1788 = vmul.f32 %v1527, %v1527
      %v1789 = vmul.f32 %v1528, %v1528
      %v1790 = vmul.f32 %v1529, %v1529
      %v1791 = vmul.f32 %v1530, %v1530
      %v1792 = vmul.f32 %v1531, %v1531
      %v1793 = vmul.f32 %v1532, %v1532
      %v1794 = vmul.f32 %v1533, %v1533
      %v1795 = vmul.f32 %v1534, %v1534
      %v1796 = vmul.f32 %v1535, %v1535
      %v1797 = vmul.f32 %v1536, %v1536
      %v1798 = vmul.f32 %v1537, %v1537
      %v1799 = vmul.f32 %v1538, %v1538
      %v1800 = vmul.f32 %v1539, %v1539
      %v1801 = vmul.f32 %v1540, %v1540
      %v1802 = vmul.f32 %v1541, %v1541
      %v1803 = vmul.f32 %v1542, %v1542
      %v1804 = vmul.f32 %v1543, %v1543
      %v1805 = vmul.f32 %v1544, %v1544
      %v1806 = vmul.f32 %v1545, %v1545
      %v1807 = vmul.f32 %v1546, %v1546
      %v1808 = vmul.f32 %v1547, %v1547
      %v1809 = vmul.f32 %v1548, %v1548
      %v1810 = vmul.f32 %v1549, %v1549
      %v1811 = vmul.f32 %v1550, %v1550
      %v1812 = vmul.f32 %v1551, %v1551
      %v1813 = vmul.f32 %v1552, %v1552
      %v1814 = vmul.f32 %v1553, %v1553
      %v1815 = vmul.f32 %v1554, %v1554
      %v1816 = vmul.f32 %v1555, %v1555
      %v1817 = vmul.f32 %v1556, %v1556
      %v1818 = vmul.f32 %v1557, %v1557
      %v1819 = vmul.f32 %v1558, %v1558
      %v1820 = vmul.f32 %v1559, %v1559
      %v1821 = vmul.f32 %v1560, %v1560
      %v1822 = vmul.f32 %v1561, %v1561
      %v1823 = vmul.f32 %v1562, %v1562
      %v1824 = vmul.f32 %v1563, %v1563
      %v1825 = vmul.f32 %v1564, %v1564
      %v1826 = vmul.f32 %v1565, %v1565
      %v1827 = vmul.f32 %v1566, %v1566
      %v1828 = vmul.f32 %v1567, %v1567
      %v1829 = vmul.f32 %v1568, %v1568
      %v1830 = vmul.f32 %v1569, %v1569
      %v1831 = vmul.f32 %v1570, %v1570
      %v1832 = vmul.f32 %v1571, %v1571
      %v1833 = vmul.f32 %v1572, %v1572
      %v1834 = vmul.f32 %v1573, %v1573
      %v1835 = vmul.f32 %v1574, %v1574
      %v1836 = vmul.f32 %v1575, %v1575
      %v1837 = vmul.f32 %v1576, %v1576
      %v1838 = vmul.f32 %v1577, %v1577
      %v1839 = vmul.f32 %v1578, %v1578
      %v1840 = vmul.f32 %v1579, %v1579
      %v1841 = vmul.f32 %v1580, %v1580
      %v1842 = vmul.f32 %v1581, %v1581
      %v1843 = vmul.f32 %v1582, %v1582
      %v1844 = vmul.f32 %v1583, %v1583
      %v1845 = vmul.f32 %v1584, %v1584
      %v1846 = vmul.f32 %v1585, %v1585
      %v1847 = vmul.f32 %v1586, %v1586
      %v1848 = vmul.f32 %v1587, %v1587
      %v1849 = vmul.f32 %v1588, %v1588
      %v1850 = vmul.f32 %v1589, %v1589
      %v1851 = vmul.f32 %v1590, %v1590
      %v1852 = vadd.f32 %v1724, %v1725
      %v1853 = vadd.f32 %v1852, %v1726
      %v1854 = vadd.f32 %v1853, %v1727
      %v1855 = vadd.f32 %v1854, %v1728
      %v1856 = vadd.f32 %v1855, %v1729
      %v1857 = vadd.f32 %v1856, %v1730
      %v1858 = vadd.f32 %v1857, %v1731
      %v1859 = vadd.f32 %v1858, %v1732
      %v1860 = vadd.f32 %v1859, %v1733
      %v1861 = vadd.f32 %v1860, %v1734
      %v1862 = vadd.f32 %v1861, %v1735
      %v1863 = vadd.f32 %v1862, %v1736
      %v1864 = vadd.f32 %v1863, %v1737
      %v1865 = vadd.f32 %v1864, %v1738
      %v1866 = vadd.f32 %v1865, %v1739
      %v1867 = vadd.f32 %v1866, %v1740
      %v1868 = vadd.f32 %v1867, %v1741
      %v1869 = vadd.f32 %v1868, %v1742
      %v1870 = vadd.f32 %v1869, %v1743
      %v1871 = vadd.f32 %v1870, %v1744
      %v1872 = vadd.f32 %v1871, %v1745
      %v1873 = vadd.f32 %v1872, %v1746
      %v1874 = vadd.f32 %v1873, %v1747
      %v1875 = vadd.f32 %v1874, %v1748
      %v1876 = vadd.f32 %v1875, %v1749
      %v1877 = vadd.f32 %v1876, %v1750
      %v1878 = vadd.f32 %v1877, %v1751
      %v1879 = vadd.f32 %v1878, %v1752
      %v1880 = vadd.f32 %v1879, %v1753
      %v1881 = vadd.f32 %v1880, %v1754
      %v1882 = vadd.f32 %v1881, %v1755
      %v1883 = vadd.f32 %v1882, %v1756
      %v1884 = vadd.f32 %v1883, %v1757
      %v1885 = vadd.f32 %v1884, %v1758
      %v1886 = vadd.f32 %v1885, %v1759
      %v1887 = vadd.f32 %v1886, %v1760
      %v1888 = vadd.f32 %v1887, %v1761
      %v1889 = vadd.f32 %v1888, %v1762
      %v1890 = vadd.f32 %v1889, %v1763
      %v1891 = vadd.f32 %v1890, %v1764
      %v1892 = vadd.f32 %v1891, %v1765
      %v1893 = vadd.f32 %v1892, %v1766
      %v1894 = vadd.f32 %v1893, %v1767
      %v1895 = vadd.f32 %v1894, %v1768
      %v1896 = vadd.f32 %v1895, %v1769
      %v1897 = vadd.f32 %v1896, %v1770
      %v1898 = vadd.f32 %v1897, %v1771
      %v1899 = vadd.f32 %v1898, %v1772
      %v1900 = vadd.f32 %v1899, %v1773
      %v1901 = vadd.f32 %v1900, %v1774
      %v1902 = vadd.f32 %v1901, %v1775
      %v1903 = vadd.f32 %v1902, %v1776
      %v1904 = vadd.f32 %v1903, %v1777
      %v1905 = vadd.f32 %v1904, %v1778
      %v1906 = vadd.f32 %v1905, %v1779
      %v1907 = vadd.f32 %v1906, %v1780
      %v1908 = vadd.f32 %v1907, %v1781
      %v1909 = vadd.f32 %v1908, %v1782
      %v1910 = vadd.f32 %v1909, %v1783
      %v1911 = vadd.f32 %v1910, %v1784
      %v1912 = vadd.f32 %v1911, %v1785
      %v1913 = vadd.f32 %v1912, %v1786
      %v1914 = vadd.f32 %v1913, %v1787
      %v1915 = vadd.f32 %v1914, %v1788
      %v1916 = vadd.f32 %v1915, %v1789
      %v1917 = vadd.f32 %v1916, %v1790
      %v1918 = vadd.f32 %v1917, %v1791
      %v1919 = vadd.f32 %v1918, %v1792
      %v1920 = vadd.f32 %v1919, %v1793
      %v1921 = vadd.f32 %v1920, %v1794
      %v1922 = vadd.f32 %v1921, %v1795
      %v1923 = vadd.f32 %v1922, %v1796
      %v1924 = vadd.f32 %v1923, %v1797
      %v1925 = vadd.f32 %v1924, %v1798
      %v1926 = vadd.f32 %v1925, %v1799
      %v1927 = vadd.f32 %v1926, %v1800
      %v1928 = vadd.f32 %v1927, %v1801
      %v1929 = vadd.f32 %v1928, %v1802
      %v1930 = vadd.f32 %v1929, %v1803
      %v1931 = vadd.f32 %v1930, %v1804
      %v1932 = vadd.f32 %v1931, %v1805
      %v1933 = vadd.f32 %v1932, %v1806
      %v1934 = vadd.f32 %v1933, %v1807
      %v1935 = vadd.f32 %v1934, %v1808
      %v1936 = vadd.f32 %v1935, %v1809
      %v1937 = vadd.f32 %v1936, %v1810
      %v1938 = vadd.f32 %v1937, %v1811
      %v1939 = vadd.f32 %v1938, %v1812
      %v1940 = vadd.f32 %v1939, %v1813
      %v1941 = vadd.f32 %v1940, %v1814
      %v1942 = vadd.f32 %v1941, %v1815
      %v1943 = vadd.f32 %v1942, %v1816
      %v1944 = vadd.f32 %v1943, %v1817
      %v1945 = vadd.f32 %v1944, %v1818
      %v1946 = vadd.f32 %v1945, %v1819
      %v1947 = vadd.f32 %v1946, %v1820
      %v1948 = vadd.f32 %v1947, %v1821
      %v1949 = vadd.f32 %v1948, %v1822
      %v1950 = vadd.f32 %v1949, %v1823
      %v1951 = vadd.f32 %v1950, %v1824
      %v1952 = vadd.f32 %v1951, %v1825
      %v1953 = vadd.f32 %v1952, %v1826
      %v1954 = vadd.f32 %v1953, %v1827
      %v1955 = vadd.f32 %v1954, %v1828
      %v1956 = vadd.f32 %v1955, %v1829
      %v1957 = vadd.f32 %v1956, %v1830
      %v1958 = vadd.f32 %v1957, %v1831
      %v1959 = vadd.f32 %v1958, %v1832
      %v1960 = vadd.f32 %v1959, %v1833
      %v1961 = vadd.f32 %v1960, %v1834
      %v1962 = vadd.f32 %v1961, %v1835
      %v1963 = vadd.f32 %v1962, %v1836
      %v1964 = vadd.f32 %v1963, %v1837
      %v1965 = vadd.f32 %v1964, %v1838
      %v1966 = vadd.f32 %v1965, %v1839
      %v1967 = vadd.f32 %v1966, %v1840
      %v1968 = vadd.f32 %v1967, %v1841
      %v1969 = vadd.f32 %v1968, %v1842
      %v1970 = vadd.f32 %v1969, %v1843
      %v1971 = vadd.f32 %v1970, %v1844
      %v1972 = vadd.f32 %v1971, %v1845
      %v1973 = vadd.f32 %v1972, %v1846
      %v1974 = vadd.f32 %v1973, %v1847
      %v1975 = vadd.f32 %v1974, %v1848
      %v1976 = vadd.f32 %v1975, %v1849
      %v1977 = vadd.f32 %v1976, %v1850
      %v1978 = vadd.f32 %v1977, %v1851
      %v1979 = vrot.slane %v1978, 4
      %v1980 = vadd.f32 %v1978, %v1979
      %v1981 = vrot.slane %v1980, 2
      %v1982 = vadd.f32 %v1980, %v1981
      %v1983 = vrot.slane %v1982, 1
      %v1984 = vadd.f32 %v1982, %v1983
      %vm1985 = vcmask 1040384
      %v1986 = vsel %vm1985, %v1723, %v1984
      %1987 = vst [vmem:[%s233] sm:$0x3] %v1986
      %s1988 = smul.u32 16, %s20
      %p1989 = scmp.lt.s32.totalorder %s19, 1
      %s1990 = scalar_select %p1989, %s19, 1
      %p1991 = scmp.lt.s32.totalorder %s1988, 15
      %s1992 = scalar_select %p1991, %s1988, 15
      %s1993 = smul.addr %s1992, 8
      %s1994 = smul.addr %s1990, 128
      %s1995 = sadd.s32 %s1993, %s1994
      %s1996 = smul.addr %s1995, 8
      %s1997 = scalar_lea.vmem %s2, %s1996
      %p1998 = scmp.lt.s32.totalorder %s19, 1
      %s1999 = scalar_select %p1998, %s19, 1
      %p2000 = scmp.lt.s32.totalorder %s20, 0
      %s2001 = scalar_select %p2000, %s20, 0
      %s2002 = sadd.s32 %s2001, %s1999
      %s2003 = smul.addr %s2002, 2
      %s2004 = scalar_lea.vmem %s3, %s2003
      // Predicated region
      $region29: #{conv_transpose_bn_relu.1} parent=27 // pred_check
        %p2005 = pneg %p96
      $region30: #{conv_transpose_bn_relu.1} parent=27 // pred_check_branch
        %2007 = sbr.rel (%p2005) target = $region32
      $region31: #{conv_transpose_bn_relu.1} parent=27 // pred_region
        %s2008 = smul.u32 16, %s20
      $region32: #{conv_transpose_bn_relu.1} parent=27 // pred_fallthru
        _
      // Predicated region
      $region33: #{conv_transpose_bn_relu.1} parent=27 // pred_check
        %p2009 = pneg %p124
      $region34: #{conv_transpose_bn_relu.1} parent=27 // pred_check_branch
        %2011 = sbr.rel (%p2009) target = $region36
      $region35: #{conv_transpose_bn_relu.1} parent=27 // pred_region
        _
      $region36: #{conv_transpose_bn_relu.1} parent=27 // pred_fallthru
        _
    $region28: #{conv_transpose_bn_relu.1} parent=5 // pred_fallthru
      _
    %p2012 = scmp.le.s32.totalorder 2, %s10
    // Predicated region
    $region37: #{conv_transpose_bn_relu.1} parent=5 // pred_check
      %p2013 = pneg %p2012
    $region38: #{conv_transpose_bn_relu.1} parent=5 // pred_check_branch
      %2015 = sbr.rel (%p2013) target = $region40
    $region39: #{conv_transpose_bn_relu.1} parent=5 // pred_region
      %s2016 = ssub.s32 %s10, 2
      // Predicated region
      $region41: #{conv_transpose_bn_relu.1} parent=39 // pred_check
        %p2017 = pneg %p102
      $region42: #{conv_transpose_bn_relu.1} parent=39 // pred_check_branch
        %2019 = sbr.rel (%p2017) target = $region44
      $region43: #{conv_transpose_bn_relu.1} parent=39 // pred_region
        %s2020 = smul.u32 16, %s22
        %p2021 = scmp.lt.s32.totalorder %s21, 1
        %s2022 = scalar_select %p2021, %s21, 1
        %p2023 = scmp.lt.s32.totalorder %s2020, 15
        %s2024 = scalar_select %p2023, %s2020, 15
        %s2025 = smul.addr %s2024, 8
        %s2026 = smul.addr %s2022, 128
        %s2027 = sadd.s32 %s2025, %s2026
        %s2028 = smul.addr %s2027, 8
        %s2029 = scalar_lea.vmem %s2, %s2028
      $region44: #{conv_transpose_bn_relu.1} parent=39 // pred_fallthru
        _
      // Predicated region
      $region45: #{conv_transpose_bn_relu.1} parent=39 // pred_check
        %p2030 = pneg %p130
      $region46: #{conv_transpose_bn_relu.1} parent=39 // pred_check_branch
        %2032 = sbr.rel (%p2030) target = $region48
      $region47: #{conv_transpose_bn_relu.1} parent=39 // pred_region
        %p2033 = scmp.lt.s32.totalorder %s21, 1
        %s2034 = scalar_select %p2033, %s21, 1
        %p2035 = scmp.lt.s32.totalorder %s22, 0
        %s2036 = scalar_select %p2035, %s22, 0
        %s2037 = sadd.s32 %s2036, %s2034
        %s2038 = smul.addr %s2037, 2
        %s2039 = scalar_lea.vmem %s3, %s2038
      $region48: #{conv_transpose_bn_relu.1} parent=39 // pred_fallthru
        _
    $region40: #{conv_transpose_bn_relu.1} parent=5 // pred_fallthru
      _
  $region6: #{conv_transpose_bn_relu.1} parent=0 // loop_footer
    %s14 = sadd.s32 1, %s10
  $region7: #{conv_transpose_bn_relu.1} parent=0 // loop_footer_branch
    %9 = sbr.rel target = $region3
  $region8: #{conv_transpose_bn_relu.1} parent=0 // loop_exit
    _

</llo_original>
